<compile_context>
chip_gen: v7x
topology: tpu7x:2x2x1
jax: 0.10.0
libtpu: 0.0.40
codegen_flags: <defaults>
</compile_context>

<pallas_src>
import jax
import jax.numpy as jnp
from jax.experimental import pallas as pl
from jax.experimental.pallas import tpu as pltpu

# ----------------------------- configuration --------------------------------
VOCAB = 50
VOCAB_PAD = 64      # padded vocab (unmasked one-hot / matmul K)
EMBED = 32          # embed_dim
HIDDEN = 32         # hidden_dim
CLASSES = 7         # num_classes
BATCH = 2
BATCH_PAD = 8       # one sublane group
SEQ = 8
LANE_PAD = 128      # lane-dense output width
SLAB_W = 8 * HIDDEN  # 256: interleaved gates for both directions

# slab row layout (all offsets multiples of 8)
R_LUT = 0                         # (2*VOCAB_PAD, 256) biased block-diag LUT
R_WHH = R_LUT + 2 * VOCAB_PAD     # 128: (2H, 256) block-diag recurrent weights
R_FC1W = R_WHH + 2 * HIDDEN       # 192: (2H, 128) fc1 weights (cols 0:H real)
R_FC1B = R_FC1W + 2 * HIDDEN      # 256: fc1 bias in row 256, cols 0:H
R_FC2W = R_FC1B + 8               # 264: (128, 128) fc2 weights (rows 0:H real)
R_FC2B = R_FC2W + LANE_PAD        # 392: fc2 bias in row 392, cols 0:CLASSES
SLAB_ROWS = R_FC2B + 8            # 400


# ------------------------------- Pallas kernel ------------------------------
def classifier_kernel(tok_ref,    # (T*BP, 2) int32: [fwd_tok, rev_tok + VOCAB_PAD]
                      slab_ref,   # (SLAB_ROWS, 256) f32 packed weights
                      out_ref):   # (BP, 128) f32
    TB = tok_ref.shape[0]
    BP = out_ref.shape[0]
    T = TB // BP
    H = HIDDEN
    V2 = 2 * VOCAB_PAD            # 128

    # ---- one-hot over the doubled vocab (fwd hit in 0:64, bwd hit in 64:128) ----
    tok = tok_ref[...]                                               # (TB, 2)
    iota = jax.lax.broadcasted_iota(jnp.int32, (TB, V2), 1)
    onehot = jnp.logical_or(iota == tok[:, 0:1],
                            iota == tok[:, 1:2]).astype(jnp.float32)  # (TB, 128)

    # ---- single matmul: bias-included input gates for both directions, in
    #      per-step schedule order (row block s: fwd time s / bwd time T-1-s) ----
    lut = slab_ref[R_LUT:R_LUT + V2, :]                              # (128, 256)
    gin = jnp.dot(onehot, lut, preferred_element_type=jnp.float32)   # (TB, 256)

    whh = slab_ref[R_WHH:R_WHH + 2 * H, :]                           # (64, 256)

    # gate column layout: [i_f,i_b, f_f,f_b, g_f,g_b, o_f,o_b], each H wide.
    h = jnp.zeros((BP, 2 * H), jnp.float32)   # [h_f | h_b]
    c = jnp.zeros((BP, 2 * H), jnp.float32)   # [c_f | c_b]

    for step in range(T):  # fully unrolled, fused bidirectional recurrence
        g = (gin[step * BP:(step + 1) * BP, :]
             + jnp.dot(h, whh, preferred_element_type=jnp.float32))  # (BP, 256)
        s = jax.nn.sigmoid(g)
        th = jnp.tanh(g)
        c = s[:, 2 * H:4 * H] * c + s[:, 0:2 * H] * th[:, 4 * H:6 * H]
        h = s[:, 6 * H:8 * H] * jnp.tanh(c)

    # ---- classifier head (lane-dense, fully padded to 128 lanes) ----
    fc1_w = slab_ref[R_FC1W:R_FC1W + 2 * H, 0:LANE_PAD]              # (64, 128)
    fc1_b = slab_ref[R_FC1B:R_FC1B + 1, 0:LANE_PAD]                  # (1, 128)
    fc2_w = slab_ref[R_FC2W:R_FC2W + LANE_PAD, 0:LANE_PAD]           # (128, 128)
    fc2_b = slab_ref[R_FC2B:R_FC2B + 1, 0:LANE_PAD]                  # (1, 128)

    x1 = jnp.maximum(
        jnp.dot(h, fc1_w, preferred_element_type=jnp.float32) + fc1_b, 0.0)
    # dropout == identity (eval mode)
    out_ref[...] = (jnp.dot(x1, fc2_w, preferred_element_type=jnp.float32)
                    + fc2_b)


# ------------------------------ weight packing -------------------------------
def prepare_params(params):
    """One-time packing of all weights into a single (SLAB_ROWS, 256) slab."""
    H = HIDDEN

    def gate_interleave(a, b):
        # a, b: (R, 4H) in [i,f,g,o] order -> (R, 8H) in
        # [i_f,i_b, f_f,f_b, g_f,g_b, o_f,o_b] order.
        R = a.shape[0]
        return jnp.stack([a.reshape(R, 4, H), b.reshape(R, 4, H)],
                         axis=2).reshape(R, 8 * H)

    emb_pad = jnp.zeros((VOCAB_PAD, EMBED), jnp.float32)
    emb_pad = emb_pad.at[:VOCAB].set(params["embedding"])

    # embedding folded into the input projection, bias folded into LUT rows
    lut_f = emb_pad @ params["wih_f"] + params["b_f"]          # (64, 4H)
    lut_b = emb_pad @ params["wih_b"] + params["b_b"]          # (64, 4H)
    lut2 = jnp.concatenate(
        [gate_interleave(lut_f, jnp.zeros_like(lut_f)),
         gate_interleave(jnp.zeros_like(lut_b), lut_b)], axis=0)   # (128, 256)

    whh_bd = jnp.concatenate(
        [gate_interleave(params["whh_f"], jnp.zeros_like(params["whh_f"])),
         gate_interleave(jnp.zeros_like(params["whh_b"]), params["whh_b"])],
        axis=0)                                                    # (64, 256)

    def pad_block(mat, rows):
        out = jnp.zeros((rows, SLAB_W), jnp.float32)
        return out.at[:mat.shape[0], :mat.shape[1]].set(mat)

    slab = jnp.concatenate([
        lut2,                                    # rows   0:128
        whh_bd,                                  # rows 128:192
        pad_block(params["fc1_w"], 2 * H),       # rows 192:256 (cols 0:32 real)
        pad_block(params["fc1_b"], 8),           # rows 256:264 (row 256 real)
        pad_block(params["fc2_w"], LANE_PAD),    # rows 264:392 (rows 0:32 real)
        pad_block(params["fc2_b"], 8),           # rows 392:400 (row 392 real)
    ], axis=0)
    assert slab.shape == (SLAB_ROWS, SLAB_W)
    return slab


# ------------------------------ wrapper / glue -------------------------------
@jax.jit
def command_classifier_forward(tokens, slab):
    """tokens: (B, T) int32. Returns logits (B, CLASSES) float32."""
    B, T = tokens.shape
    BP = BATCH_PAD
    # tiny token rearrangement (fused into the same executable):
    # pad batch to 8, time-major rows; col 0 = fwd token, col 1 = reversed-time
    # token offset into the second vocab block.
    tok_pad = jnp.zeros((BP, T), jnp.int32).at[:B, :].set(tokens.astype(jnp.int32))
    tok_f = tok_pad.T.reshape(T * BP, 1)
    tok_b = tok_pad[:, ::-1].T.reshape(T * BP, 1) + VOCAB_PAD
    tok_pair = jnp.concatenate([tok_f, tok_b], axis=1)              # (T*BP, 2)

    vmem = pl.BlockSpec(memory_space=pltpu.MemorySpace.VMEM)
    logits_padded = pl.pallas_call(
        classifier_kernel,
        out_shape=jax.ShapeDtypeStruct((BP, LANE_PAD), jnp.float32),
        in_specs=[vmem, vmem],
        out_specs=vmem,
    )(tok_pair, slab)
    return logits_padded[:B, :CLASSES]


# ----------------------------- reference (pure JAX) --------------------------
def reference_forward(tokens, params):
    emb = params["embedding"][tokens]
    B, T, _ = emb.shape
    H = HIDDEN

    def run(order, wih, whh, b):
        h = jnp.zeros((B, H), jnp.float32)
        c = jnp.zeros((B, H), jnp.float32)
        for t in order:
            x_t = emb[:, t, :]
            gates = x_t @ wih + h @ whh + b
            i = jax.nn.sigmoid(gates[:, :H])
            f = jax.nn.sigmoid(gates[:, H:2 * H])
            g = jnp.tanh(gates[:, 2 * H:3 * H])
            o = jax.nn.sigmoid(gates[:, 3 * H:4 * H])
            c = f * c + i * g
            h = o * jnp.tanh(c)
        return h

    h_fwd = run(range(T), params["wih_f"], params["whh_f"], params["b_f"])
    h_bwd = run(range(T - 1, -1, -1), params["wih_b"], params["whh_b"], params["b_b"])
    hidden = jnp.concatenate([h_fwd, h_bwd], axis=1)
    x1 = jnp.maximum(hidden @ params["fc1_w"] + params["fc1_b"], 0.0)
    return x1 @ params["fc2_w"] + params["fc2_b"]


# ------------------------------- param init ---------------------------------
def init_params(key):
    ks = jax.random.split(key, 12)
    s_lstm = 1.0 / jnp.sqrt(HIDDEN)
    s_fc1 = 1.0 / jnp.sqrt(2 * HIDDEN)
    s_fc2 = 1.0 / jnp.sqrt(HIDDEN)
    u = lambda k, shape, s: jax.random.uniform(k, shape, jnp.float32, -s, s)
    return {
        "embedding": jax.random.normal(ks[0], (VOCAB, EMBED), jnp.float32),
        # LSTM weights stored pre-transposed: (in_dim, 4H); combined bias (1, 4H)
        "wih_f": u(ks[1], (EMBED, 4 * HIDDEN), s_lstm),
        "whh_f": u(ks[2], (HIDDEN, 4 * HIDDEN), s_lstm),
        "b_f": u(ks[3], (1, 4 * HIDDEN), s_lstm) + u(ks[4], (1, 4 * HIDDEN), s_lstm),
        "wih_b": u(ks[5], (EMBED, 4 * HIDDEN), s_lstm),
        "whh_b": u(ks[6], (HIDDEN, 4 * HIDDEN), s_lstm),
        "b_b": u(ks[7], (1, 4 * HIDDEN), s_lstm) + u(ks[8], (1, 4 * HIDDEN), s_lstm),
        "fc1_w": u(ks[9], (2 * HIDDEN, HIDDEN), s_fc1),
        "fc1_b": u(ks[10], (1, HIDDEN), s_fc1),
        "fc2_w": u(ks[11], (HIDDEN, CLASSES), s_fc2),
        "fc2_b": jnp.zeros((1, CLASSES), jnp.float32),
    }


# ---------------------------------- main -------------------------------------
if __name__ == "__main__":
    key = jax.random.PRNGKey(0)
    k_tok, k_par = jax.random.split(key)
    tokens = jax.random.randint(k_tok, (BATCH, SEQ), 0, VOCAB, dtype=jnp.int32)
    params = init_params(k_par)
    slab = prepare_params(params)

    logits = command_classifier_forward(tokens, slab)
    logits = jax.block_until_ready(logits)

    ref = reference_forward(tokens, params)
    assert logits.shape == (BATCH, CLASSES)
    assert jnp.allclose(logits, ref, atol=1e-4, rtol=1e-4), (logits, ref)

    # TODO(synk): dropout implemented as identity (eval-mode semantics);
    # training-mode stochastic dropout would use pltpu.prng_* + mask.
    print("KERNEL_OK")
</pallas_src>

<mosaic_0001>
module attributes {stable_mosaic.version = 11 : i64} {
  func.func @classifier_kernel(%arg0: memref<64x2xi32, #tpu.memory_space<vmem>>, %arg1: memref<400x256xf32, #tpu.memory_space<vmem>>, %arg2: memref<8x128xf32, #tpu.memory_space<vmem>>) attributes {dimension_semantics = [], scalar_prefetch = 0 : i64, scratch_operands = 0 : i64, tpu.core_type = #tpu.core_type<tc>} {
    %c0 = arith.constant 0 : index
    %c0_0 = arith.constant 0 : index
    %0 = vector.load %arg0[%c0, %c0_0] : memref<64x2xi32, #tpu.memory_space<vmem>>, vector<64x2xi32>
    %1 = tpu.iota {dimensions = array<i32: 1>} : vector<64x128xi32>
    %2 = vector.extract_strided_slice %0 {offsets = [0, 0], sizes = [64, 1], strides = [1, 1]} : vector<64x2xi32> to vector<64x1xi32>
    %3 = vector.broadcast %2 : vector<64x1xi32> to vector<64x128xi32>
    %4 = arith.cmpi eq, %1, %3 : vector<64x128xi32>
    %5 = vector.extract_strided_slice %0 {offsets = [0, 1], sizes = [64, 1], strides = [1, 1]} : vector<64x2xi32> to vector<64x1xi32>
    %6 = vector.broadcast %5 : vector<64x1xi32> to vector<64x128xi32>
    %7 = arith.cmpi eq, %1, %6 : vector<64x128xi32>
    %8 = arith.ori %4, %7 : vector<64x128xi1>
    %9 = arith.extui %8 : vector<64x128xi1> to vector<64x128xi32>
    %10 = arith.sitofp %9 : vector<64x128xi32> to vector<64x128xf32>
    %c0_1 = arith.constant 0 : index
    %c0_2 = arith.constant 0 : index
    %11 = vector.load %arg1[%c0_1, %c0_2] : memref<400x256xf32, #tpu.memory_space<vmem>>, vector<128x256xf32>
    %cst = arith.constant dense<0.000000e+00> : vector<64x256xf32>
    %12 = tpu.matmul %10, %11, %cst {dimension_numbers = #tpu.dot_dimension_numbers<[1], [0], [0], [1], [0, 0, 1, 1], [], []>} : vector<64x128xf32>, vector<128x256xf32>, vector<64x256xf32> -> vector<64x256xf32>
    %c128 = arith.constant 128 : index
    %c0_3 = arith.constant 0 : index
    %13 = vector.load %arg1[%c128, %c0_3] : memref<400x256xf32, #tpu.memory_space<vmem>>, vector<64x256xf32>
    %cst_4 = arith.constant 0.000000e+00 : f32
    %14 = vector.broadcast %cst_4 : f32 to vector<8x64xf32>
    %cst_5 = arith.constant 0.000000e+00 : f32
    %15 = vector.broadcast %cst_5 : f32 to vector<8x64xf32>
    %16 = vector.extract_strided_slice %12 {offsets = [0, 0], sizes = [8, 256], strides = [1, 1]} : vector<64x256xf32> to vector<8x256xf32>
    %cst_6 = arith.constant dense<0.000000e+00> : vector<8x256xf32>
    %17 = tpu.matmul %14, %13, %cst_6 {dimension_numbers = #tpu.dot_dimension_numbers<[1], [0], [0], [1], [0, 0, 1, 1], [], []>} : vector<8x64xf32>, vector<64x256xf32>, vector<8x256xf32> -> vector<8x256xf32>
    %18 = arith.addf %16, %17 : vector<8x256xf32>
    %19 = arith.negf %18 : vector<8x256xf32>
    %20 = math.exp %19 : vector<8x256xf32>
    %cst_7 = arith.constant 1.000000e+00 : f32
    %21 = vector.broadcast %cst_7 : f32 to vector<8x256xf32>
    %22 = arith.addf %21, %20 : vector<8x256xf32>
    %23 = arith.divf %21, %22 : vector<8x256xf32>
    %24 = math.tanh %18 : vector<8x256xf32>
    %25 = vector.extract_strided_slice %23 {offsets = [0, 64], sizes = [8, 64], strides = [1, 1]} : vector<8x256xf32> to vector<8x64xf32>
    %26 = arith.mulf %25, %15 : vector<8x64xf32>
    %27 = vector.extract_strided_slice %23 {offsets = [0, 0], sizes = [8, 64], strides = [1, 1]} : vector<8x256xf32> to vector<8x64xf32>
    %28 = vector.extract_strided_slice %24 {offsets = [0, 128], sizes = [8, 64], strides = [1, 1]} : vector<8x256xf32> to vector<8x64xf32>
    %29 = arith.mulf %27, %28 : vector<8x64xf32>
    %30 = arith.addf %26, %29 : vector<8x64xf32>
    %31 = vector.extract_strided_slice %23 {offsets = [0, 192], sizes = [8, 64], strides = [1, 1]} : vector<8x256xf32> to vector<8x64xf32>
    %32 = math.tanh %30 : vector<8x64xf32>
    %33 = arith.mulf %31, %32 : vector<8x64xf32>
    %34 = vector.extract_strided_slice %12 {offsets = [8, 0], sizes = [8, 256], strides = [1, 1]} : vector<64x256xf32> to vector<8x256xf32>
    %cst_8 = arith.constant dense<0.000000e+00> : vector<8x256xf32>
    %35 = tpu.matmul %33, %13, %cst_8 {dimension_numbers = #tpu.dot_dimension_numbers<[1], [0], [0], [1], [0, 0, 1, 1], [], []>} : vector<8x64xf32>, vector<64x256xf32>, vector<8x256xf32> -> vector<8x256xf32>
    %36 = arith.addf %34, %35 : vector<8x256xf32>
    %37 = arith.negf %36 : vector<8x256xf32>
    %38 = math.exp %37 : vector<8x256xf32>
    %cst_9 = arith.constant 1.000000e+00 : f32
    %39 = vector.broadcast %cst_9 : f32 to vector<8x256xf32>
    %40 = arith.addf %39, %38 : vector<8x256xf32>
    %41 = arith.divf %39, %40 : vector<8x256xf32>
    %42 = math.tanh %36 : vector<8x256xf32>
    %43 = vector.extract_strided_slice %41 {offsets = [0, 64], sizes = [8, 64], strides = [1, 1]} : vector<8x256xf32> to vector<8x64xf32>
    %44 = arith.mulf %43, %30 : vector<8x64xf32>
    %45 = vector.extract_strided_slice %41 {offsets = [0, 0], sizes = [8, 64], strides = [1, 1]} : vector<8x256xf32> to vector<8x64xf32>
    %46 = vector.extract_strided_slice %42 {offsets = [0, 128], sizes = [8, 64], strides = [1, 1]} : vector<8x256xf32> to vector<8x64xf32>
    %47 = arith.mulf %45, %46 : vector<8x64xf32>
    %48 = arith.addf %44, %47 : vector<8x64xf32>
    %49 = vector.extract_strided_slice %41 {offsets = [0, 192], sizes = [8, 64], strides = [1, 1]} : vector<8x256xf32> to vector<8x64xf32>
    %50 = math.tanh %48 : vector<8x64xf32>
    %51 = arith.mulf %49, %50 : vector<8x64xf32>
    %52 = vector.extract_strided_slice %12 {offsets = [16, 0], sizes = [8, 256], strides = [1, 1]} : vector<64x256xf32> to vector<8x256xf32>
    %cst_10 = arith.constant dense<0.000000e+00> : vector<8x256xf32>
    %53 = tpu.matmul %51, %13, %cst_10 {dimension_numbers = #tpu.dot_dimension_numbers<[1], [0], [0], [1], [0, 0, 1, 1], [], []>} : vector<8x64xf32>, vector<64x256xf32>, vector<8x256xf32> -> vector<8x256xf32>
    %54 = arith.addf %52, %53 : vector<8x256xf32>
    %55 = arith.negf %54 : vector<8x256xf32>
    %56 = math.exp %55 : vector<8x256xf32>
    %cst_11 = arith.constant 1.000000e+00 : f32
    %57 = vector.broadcast %cst_11 : f32 to vector<8x256xf32>
    %58 = arith.addf %57, %56 : vector<8x256xf32>
    %59 = arith.divf %57, %58 : vector<8x256xf32>
    %60 = math.tanh %54 : vector<8x256xf32>
    %61 = vector.extract_strided_slice %59 {offsets = [0, 64], sizes = [8, 64], strides = [1, 1]} : vector<8x256xf32> to vector<8x64xf32>
    %62 = arith.mulf %61, %48 : vector<8x64xf32>
    %63 = vector.extract_strided_slice %59 {offsets = [0, 0], sizes = [8, 64], strides = [1, 1]} : vector<8x256xf32> to vector<8x64xf32>
    %64 = vector.extract_strided_slice %60 {offsets = [0, 128], sizes = [8, 64], strides = [1, 1]} : vector<8x256xf32> to vector<8x64xf32>
    %65 = arith.mulf %63, %64 : vector<8x64xf32>
    %66 = arith.addf %62, %65 : vector<8x64xf32>
    %67 = vector.extract_strided_slice %59 {offsets = [0, 192], sizes = [8, 64], strides = [1, 1]} : vector<8x256xf32> to vector<8x64xf32>
    %68 = math.tanh %66 : vector<8x64xf32>
    %69 = arith.mulf %67, %68 : vector<8x64xf32>
    %70 = vector.extract_strided_slice %12 {offsets = [24, 0], sizes = [8, 256], strides = [1, 1]} : vector<64x256xf32> to vector<8x256xf32>
    %cst_12 = arith.constant dense<0.000000e+00> : vector<8x256xf32>
    %71 = tpu.matmul %69, %13, %cst_12 {dimension_numbers = #tpu.dot_dimension_numbers<[1], [0], [0], [1], [0, 0, 1, 1], [], []>} : vector<8x64xf32>, vector<64x256xf32>, vector<8x256xf32> -> vector<8x256xf32>
    %72 = arith.addf %70, %71 : vector<8x256xf32>
    %73 = arith.negf %72 : vector<8x256xf32>
    %74 = math.exp %73 : vector<8x256xf32>
    %cst_13 = arith.constant 1.000000e+00 : f32
    %75 = vector.broadcast %cst_13 : f32 to vector<8x256xf32>
    %76 = arith.addf %75, %74 : vector<8x256xf32>
    %77 = arith.divf %75, %76 : vector<8x256xf32>
    %78 = math.tanh %72 : vector<8x256xf32>
    %79 = vector.extract_strided_slice %77 {offsets = [0, 64], sizes = [8, 64], strides = [1, 1]} : vector<8x256xf32> to vector<8x64xf32>
    %80 = arith.mulf %79, %66 : vector<8x64xf32>
    %81 = vector.extract_strided_slice %77 {offsets = [0, 0], sizes = [8, 64], strides = [1, 1]} : vector<8x256xf32> to vector<8x64xf32>
    %82 = vector.extract_strided_slice %78 {offsets = [0, 128], sizes = [8, 64], strides = [1, 1]} : vector<8x256xf32> to vector<8x64xf32>
    %83 = arith.mulf %81, %82 : vector<8x64xf32>
    %84 = arith.addf %80, %83 : vector<8x64xf32>
    %85 = vector.extract_strided_slice %77 {offsets = [0, 192], sizes = [8, 64], strides = [1, 1]} : vector<8x256xf32> to vector<8x64xf32>
    %86 = math.tanh %84 : vector<8x64xf32>
    %87 = arith.mulf %85, %86 : vector<8x64xf32>
    %88 = vector.extract_strided_slice %12 {offsets = [32, 0], sizes = [8, 256], strides = [1, 1]} : vector<64x256xf32> to vector<8x256xf32>
    %cst_14 = arith.constant dense<0.000000e+00> : vector<8x256xf32>
    %89 = tpu.matmul %87, %13, %cst_14 {dimension_numbers = #tpu.dot_dimension_numbers<[1], [0], [0], [1], [0, 0, 1, 1], [], []>} : vector<8x64xf32>, vector<64x256xf32>, vector<8x256xf32> -> vector<8x256xf32>
    %90 = arith.addf %88, %89 : vector<8x256xf32>
    %91 = arith.negf %90 : vector<8x256xf32>
    %92 = math.exp %91 : vector<8x256xf32>
    %cst_15 = arith.constant 1.000000e+00 : f32
    %93 = vector.broadcast %cst_15 : f32 to vector<8x256xf32>
    %94 = arith.addf %93, %92 : vector<8x256xf32>
    %95 = arith.divf %93, %94 : vector<8x256xf32>
    %96 = math.tanh %90 : vector<8x256xf32>
    %97 = vector.extract_strided_slice %95 {offsets = [0, 64], sizes = [8, 64], strides = [1, 1]} : vector<8x256xf32> to vector<8x64xf32>
    %98 = arith.mulf %97, %84 : vector<8x64xf32>
    %99 = vector.extract_strided_slice %95 {offsets = [0, 0], sizes = [8, 64], strides = [1, 1]} : vector<8x256xf32> to vector<8x64xf32>
    %100 = vector.extract_strided_slice %96 {offsets = [0, 128], sizes = [8, 64], strides = [1, 1]} : vector<8x256xf32> to vector<8x64xf32>
    %101 = arith.mulf %99, %100 : vector<8x64xf32>
    %102 = arith.addf %98, %101 : vector<8x64xf32>
    %103 = vector.extract_strided_slice %95 {offsets = [0, 192], sizes = [8, 64], strides = [1, 1]} : vector<8x256xf32> to vector<8x64xf32>
    %104 = math.tanh %102 : vector<8x64xf32>
    %105 = arith.mulf %103, %104 : vector<8x64xf32>
    %106 = vector.extract_strided_slice %12 {offsets = [40, 0], sizes = [8, 256], strides = [1, 1]} : vector<64x256xf32> to vector<8x256xf32>
    %cst_16 = arith.constant dense<0.000000e+00> : vector<8x256xf32>
    %107 = tpu.matmul %105, %13, %cst_16 {dimension_numbers = #tpu.dot_dimension_numbers<[1], [0], [0], [1], [0, 0, 1, 1], [], []>} : vector<8x64xf32>, vector<64x256xf32>, vector<8x256xf32> -> vector<8x256xf32>
    %108 = arith.addf %106, %107 : vector<8x256xf32>
    %109 = arith.negf %108 : vector<8x256xf32>
    %110 = math.exp %109 : vector<8x256xf32>
    %cst_17 = arith.constant 1.000000e+00 : f32
    %111 = vector.broadcast %cst_17 : f32 to vector<8x256xf32>
    %112 = arith.addf %111, %110 : vector<8x256xf32>
    %113 = arith.divf %111, %112 : vector<8x256xf32>
    %114 = math.tanh %108 : vector<8x256xf32>
    %115 = vector.extract_strided_slice %113 {offsets = [0, 64], sizes = [8, 64], strides = [1, 1]} : vector<8x256xf32> to vector<8x64xf32>
    %116 = arith.mulf %115, %102 : vector<8x64xf32>
    %117 = vector.extract_strided_slice %113 {offsets = [0, 0], sizes = [8, 64], strides = [1, 1]} : vector<8x256xf32> to vector<8x64xf32>
    %118 = vector.extract_strided_slice %114 {offsets = [0, 128], sizes = [8, 64], strides = [1, 1]} : vector<8x256xf32> to vector<8x64xf32>
    %119 = arith.mulf %117, %118 : vector<8x64xf32>
    %120 = arith.addf %116, %119 : vector<8x64xf32>
    %121 = vector.extract_strided_slice %113 {offsets = [0, 192], sizes = [8, 64], strides = [1, 1]} : vector<8x256xf32> to vector<8x64xf32>
    %122 = math.tanh %120 : vector<8x64xf32>
    %123 = arith.mulf %121, %122 : vector<8x64xf32>
    %124 = vector.extract_strided_slice %12 {offsets = [48, 0], sizes = [8, 256], strides = [1, 1]} : vector<64x256xf32> to vector<8x256xf32>
    %cst_18 = arith.constant dense<0.000000e+00> : vector<8x256xf32>
    %125 = tpu.matmul %123, %13, %cst_18 {dimension_numbers = #tpu.dot_dimension_numbers<[1], [0], [0], [1], [0, 0, 1, 1], [], []>} : vector<8x64xf32>, vector<64x256xf32>, vector<8x256xf32> -> vector<8x256xf32>
    %126 = arith.addf %124, %125 : vector<8x256xf32>
    %127 = arith.negf %126 : vector<8x256xf32>
    %128 = math.exp %127 : vector<8x256xf32>
    %cst_19 = arith.constant 1.000000e+00 : f32
    %129 = vector.broadcast %cst_19 : f32 to vector<8x256xf32>
    %130 = arith.addf %129, %128 : vector<8x256xf32>
    %131 = arith.divf %129, %130 : vector<8x256xf32>
    %132 = math.tanh %126 : vector<8x256xf32>
    %133 = vector.extract_strided_slice %131 {offsets = [0, 64], sizes = [8, 64], strides = [1, 1]} : vector<8x256xf32> to vector<8x64xf32>
    %134 = arith.mulf %133, %120 : vector<8x64xf32>
    %135 = vector.extract_strided_slice %131 {offsets = [0, 0], sizes = [8, 64], strides = [1, 1]} : vector<8x256xf32> to vector<8x64xf32>
    %136 = vector.extract_strided_slice %132 {offsets = [0, 128], sizes = [8, 64], strides = [1, 1]} : vector<8x256xf32> to vector<8x64xf32>
    %137 = arith.mulf %135, %136 : vector<8x64xf32>
    %138 = arith.addf %134, %137 : vector<8x64xf32>
    %139 = vector.extract_strided_slice %131 {offsets = [0, 192], sizes = [8, 64], strides = [1, 1]} : vector<8x256xf32> to vector<8x64xf32>
    %140 = math.tanh %138 : vector<8x64xf32>
    %141 = arith.mulf %139, %140 : vector<8x64xf32>
    %142 = vector.extract_strided_slice %12 {offsets = [56, 0], sizes = [8, 256], strides = [1, 1]} : vector<64x256xf32> to vector<8x256xf32>
    %cst_20 = arith.constant dense<0.000000e+00> : vector<8x256xf32>
    %143 = tpu.matmul %141, %13, %cst_20 {dimension_numbers = #tpu.dot_dimension_numbers<[1], [0], [0], [1], [0, 0, 1, 1], [], []>} : vector<8x64xf32>, vector<64x256xf32>, vector<8x256xf32> -> vector<8x256xf32>
    %144 = arith.addf %142, %143 : vector<8x256xf32>
    %145 = arith.negf %144 : vector<8x256xf32>
    %146 = math.exp %145 : vector<8x256xf32>
    %cst_21 = arith.constant 1.000000e+00 : f32
    %147 = vector.broadcast %cst_21 : f32 to vector<8x256xf32>
    %148 = arith.addf %147, %146 : vector<8x256xf32>
    %149 = arith.divf %147, %148 : vector<8x256xf32>
    %150 = math.tanh %144 : vector<8x256xf32>
    %151 = vector.extract_strided_slice %149 {offsets = [0, 64], sizes = [8, 64], strides = [1, 1]} : vector<8x256xf32> to vector<8x64xf32>
    %152 = arith.mulf %151, %138 : vector<8x64xf32>
    %153 = vector.extract_strided_slice %149 {offsets = [0, 0], sizes = [8, 64], strides = [1, 1]} : vector<8x256xf32> to vector<8x64xf32>
    %154 = vector.extract_strided_slice %150 {offsets = [0, 128], sizes = [8, 64], strides = [1, 1]} : vector<8x256xf32> to vector<8x64xf32>
    %155 = arith.mulf %153, %154 : vector<8x64xf32>
    %156 = arith.addf %152, %155 : vector<8x64xf32>
    %157 = vector.extract_strided_slice %149 {offsets = [0, 192], sizes = [8, 64], strides = [1, 1]} : vector<8x256xf32> to vector<8x64xf32>
    %158 = math.tanh %156 : vector<8x64xf32>
    %159 = arith.mulf %157, %158 : vector<8x64xf32>
    %c192 = arith.constant 192 : index
    %c0_22 = arith.constant 0 : index
    %160 = vector.load %arg1[%c192, %c0_22] : memref<400x256xf32, #tpu.memory_space<vmem>>, vector<64x128xf32>
    %c256 = arith.constant 256 : index
    %c0_23 = arith.constant 0 : index
    %161 = vector.load %arg1[%c256, %c0_23] : memref<400x256xf32, #tpu.memory_space<vmem>>, vector<1x128xf32>
    %c264 = arith.constant 264 : index
    %c0_24 = arith.constant 0 : index
    %162 = vector.load %arg1[%c264, %c0_24] : memref<400x256xf32, #tpu.memory_space<vmem>>, vector<128x128xf32>
    %c392 = arith.constant 392 : index
    %c0_25 = arith.constant 0 : index
    %163 = vector.load %arg1[%c392, %c0_25] : memref<400x256xf32, #tpu.memory_space<vmem>>, vector<1x128xf32>
    %cst_26 = arith.constant dense<0.000000e+00> : vector<8x128xf32>
    %164 = tpu.matmul %159, %160, %cst_26 {dimension_numbers = #tpu.dot_dimension_numbers<[1], [0], [0], [1], [0, 0, 1, 1], [], []>} : vector<8x64xf32>, vector<64x128xf32>, vector<8x128xf32> -> vector<8x128xf32>
    %165 = vector.broadcast %161 : vector<1x128xf32> to vector<8x128xf32>
    %166 = arith.addf %164, %165 : vector<8x128xf32>
    %cst_27 = arith.constant 0.000000e+00 : f32
    %167 = vector.broadcast %cst_27 : f32 to vector<8x128xf32>
    %168 = arith.maximumf %166, %167 : vector<8x128xf32>
    %cst_28 = arith.constant dense<0.000000e+00> : vector<8x128xf32>
    %169 = tpu.matmul %168, %162, %cst_28 {dimension_numbers = #tpu.dot_dimension_numbers<[1], [0], [0], [1], [0, 0, 1, 1], [], []>} : vector<8x128xf32>, vector<128x128xf32>, vector<8x128xf32> -> vector<8x128xf32>
    %170 = vector.broadcast %163 : vector<1x128xf32> to vector<8x128xf32>
    %171 = arith.addf %169, %170 : vector<8x128xf32>
    %c0_29 = arith.constant 0 : index
    %c0_30 = arith.constant 0 : index
    %172 = vector.load %arg2[%c0_29, %c0_30] : memref<8x128xf32, #tpu.memory_space<vmem>>, vector<8x128xf32>
    tpu.vector_store %arg2[%c0_29, %c0_30], %171 {strides = array<i32>} : memref<8x128xf32, #tpu.memory_space<vmem>>, vector<8x128xf32>,
    return
  }
}

</mosaic_0001>

<llo_original>
// kernel: command_classifier_forward.1
$region0: #{command_classifier_forward.1}
  #allocation0 [shape = 'u32[]', space=smem, size = 0x4, offset = 0x4, fixed_abs, tag = 'smem constant byte address 0x4 - core index']
  #allocation1 [shape = 'u32[144,128]{1,0:T(1,128)}', space=vmem, size = 0x12000, scoped, tag = 'internal scratch']
  %s0 = inlined_call_operand.vmem [shape: s32[64,2], index: 0, kind: input, shape index: {}]
  %s1 = inlined_call_operand.hbm [shape: f32[400,256], index: 1, kind: input, shape index: {}]
  %s2 = inlined_call_operand.vmem [shape: f32[8,128], index: 2, kind: output, shape index: {}]
  %s3 = sld [smem:[#allocation0]]
  $region22: #{command_classifier_forward.1} parent=0
    _
  %s5 = ssub.s32 1, %s3
  %s6 = scalar_select 0, %s5, %s3
  $region1: #{command_classifier_forward.1} parent=0
    #allocation2 [shape = 'u8[409600]{0}', space=vmem, size = 0x64000, scoped, tag = 'input window, operand 1, single buffered']
    #allocation3 [shape = 's32[1]{0}', space=sflag, size = 0x4, scoped, tag = 'scoped memory for command_classifier_forward.1']
    %7 = vsyncpa [#allocation3], 0
    // Predicated region
    $region2: #{command_classifier_forward.1} parent=1 // pred_check
      _
    $region3: #{command_classifier_forward.1} parent=1 // pred_check_branch
      %9 = sbr.rel (0) target = $region5
    $region4: #{command_classifier_forward.1} parent=1 // pred_region
      _
    $region5: #{command_classifier_forward.1} parent=1 // pred_fallthru
      _
    // Predicated region
    $region6: #{command_classifier_forward.1} parent=1 // pred_check
      _
    $region7: #{command_classifier_forward.1} parent=1 // pred_check_branch
      %11 = sbr.rel (0) target = $region9
    $region8: #{command_classifier_forward.1} parent=1 // pred_region
      %s13 = ssub.s32 12800, 12800
      %14 = vsyncadd [#allocation3], %s13
      %s15 = sshll.u32 [#allocation2], 4
      %s16 = int_to_ptr.vmem [resolvable:$true] %s15
      %21 = dma.hbm_to_vmem [thread:$0]  %s1, 12800, %s16, [#allocation3], 256, 256, 16
    $region9: #{command_classifier_forward.1} parent=1 // pred_fallthru
      _
    // Predicated region
    $region10: #{command_classifier_forward.1} parent=1 // pred_check
      _
    $region11: #{command_classifier_forward.1} parent=1 // pred_check_branch
      %23 = sbr.rel (0) target = $region13
    $region12: #{command_classifier_forward.1} parent=1 // pred_region
      %24 = dma.done [#allocation3], 12800
    $region13: #{command_classifier_forward.1} parent=1 // pred_fallthru
      _
    %v25 = vld [vmem:[%s0] sm:$0xff]
    %v26 = vld [vmem:[%s0 + $0x8] sm:$0xff]
    %v27 = vld [vmem:[%s0 + $0x10] sm:$0xff]
    %v28 = vld [vmem:[%s0 + $0x18] sm:$0xff]
    %v29 = vld [vmem:[%s0 + $0x20] sm:$0xff]
    %v30 = vld [vmem:[%s0 + $0x28] sm:$0xff]
    %v31 = vld [vmem:[%s0 + $0x30] sm:$0xff]
    %v32 = vld [vmem:[%s0 + $0x38] sm:$0xff]
    %v33 = vlaneseq
    %v34 = vand.u32 %v33, 127
    %35 = vset.pattern.permute.xlu0 0
    %36 = vperm.xlu0 %35, %v25
    %v37 = vpop.permute.xlu0 %36
    %38 = vset.pattern.permute.xlu0 0
    %39 = vperm.xlu0 %38, %v26
    %v40 = vpop.permute.xlu0 %39
    %41 = vset.pattern.permute.xlu0 0
    %42 = vperm.xlu0 %41, %v27
    %v43 = vpop.permute.xlu0 %42
    %44 = vset.pattern.permute.xlu0 0
    %45 = vperm.xlu0 %44, %v28
    %v46 = vpop.permute.xlu0 %45
    %47 = vset.pattern.permute.xlu0 0
    %48 = vperm.xlu0 %47, %v29
    %v49 = vpop.permute.xlu0 %48
    %50 = vset.pattern.permute.xlu0 0
    %51 = vperm.xlu0 %50, %v30
    %v52 = vpop.permute.xlu0 %51
    %53 = vset.pattern.permute.xlu0 0
    %54 = vperm.xlu0 %53, %v31
    %v55 = vpop.permute.xlu0 %54
    %56 = vset.pattern.permute.xlu0 0
    %57 = vperm.xlu0 %56, %v32
    %v58 = vpop.permute.xlu0 %57
    %vm59 = vcmp.eq.s32.totalorder %v34, %v37
    %vm60 = vcmp.eq.s32.totalorder %v34, %v40
    %vm61 = vcmp.eq.s32.totalorder %v34, %v43
    %vm62 = vcmp.eq.s32.totalorder %v34, %v46
    %vm63 = vcmp.eq.s32.totalorder %v34, %v49
    %vm64 = vcmp.eq.s32.totalorder %v34, %v52
    %vm65 = vcmp.eq.s32.totalorder %v34, %v55
    %vm66 = vcmp.eq.s32.totalorder %v34, %v58
    %67 = vset.pattern.permute.xlu0 1
    %68 = vperm.xlu0 %67, %v25
    %v69 = vpop.permute.xlu0 %68
    %70 = vset.pattern.permute.xlu0 1
    %71 = vperm.xlu0 %70, %v26
    %v72 = vpop.permute.xlu0 %71
    %73 = vset.pattern.permute.xlu0 1
    %74 = vperm.xlu0 %73, %v27
    %v75 = vpop.permute.xlu0 %74
    %76 = vset.pattern.permute.xlu0 1
    %77 = vperm.xlu0 %76, %v28
    %v78 = vpop.permute.xlu0 %77
    %79 = vset.pattern.permute.xlu0 1
    %80 = vperm.xlu0 %79, %v29
    %v81 = vpop.permute.xlu0 %80
    %82 = vset.pattern.permute.xlu0 1
    %83 = vperm.xlu0 %82, %v30
    %v84 = vpop.permute.xlu0 %83
    %85 = vset.pattern.permute.xlu0 1
    %86 = vperm.xlu0 %85, %v31
    %v87 = vpop.permute.xlu0 %86
    %88 = vset.pattern.permute.xlu0 1
    %89 = vperm.xlu0 %88, %v32
    %v90 = vpop.permute.xlu0 %89
    %vm91 = vcmp.eq.s32.totalorder %v34, %v69
    %vm92 = vcmp.eq.s32.totalorder %v34, %v72
    %vm93 = vcmp.eq.s32.totalorder %v34, %v75
    %vm94 = vcmp.eq.s32.totalorder %v34, %v78
    %vm95 = vcmp.eq.s32.totalorder %v34, %v81
    %vm96 = vcmp.eq.s32.totalorder %v34, %v84
    %vm97 = vcmp.eq.s32.totalorder %v34, %v87
    %vm98 = vcmp.eq.s32.totalorder %v34, %v90
    %vm99 = vmor %vm59, %vm91
    %vm100 = vmor %vm60, %vm92
    %vm101 = vmor %vm61, %vm93
    %vm102 = vmor %vm62, %vm94
    %vm103 = vmor %vm63, %vm95
    %vm104 = vmor %vm64, %vm96
    %vm105 = vmor %vm65, %vm97
    %vm106 = vmor %vm66, %vm98
    %v107 = vsel %vm99, 1, 0
    %v108 = vsel %vm100, 1, 0
    %v109 = vsel %vm101, 1, 0
    %v110 = vsel %vm102, 1, 0
    %v111 = vsel %vm103, 1, 0
    %v112 = vsel %vm104, 1, 0
    %v113 = vsel %vm105, 1, 0
    %v114 = vsel %vm106, 1, 0
    %v115 = vcvt.s32.f32 %v107
    %v116 = vcvt.s32.f32 %v108
    %v117 = vcvt.s32.f32 %v109
    %v118 = vcvt.s32.f32 %v110
    %v119 = vcvt.s32.f32 %v111
    %v120 = vcvt.s32.f32 %v112
    %v121 = vcvt.s32.f32 %v113
    %v122 = vcvt.s32.f32 %v114
    %v123 = vld [vmem:[#allocation2] sm:$0xff]
    %v124 = vld [vmem:[#allocation2 + $0x8] sm:$0xff]
    %v125 = vld [vmem:[#allocation2 + $0x10] sm:$0xff]
    %v126 = vld [vmem:[#allocation2 + $0x18] sm:$0xff]
    %v127 = vld [vmem:[#allocation2 + $0x20] sm:$0xff]
    %v128 = vld [vmem:[#allocation2 + $0x28] sm:$0xff]
    %v129 = vld [vmem:[#allocation2 + $0x30] sm:$0xff]
    %v130 = vld [vmem:[#allocation2 + $0x38] sm:$0xff]
    %v131 = vld [vmem:[#allocation2 + $0x40] sm:$0xff]
    %v132 = vld [vmem:[#allocation2 + $0x48] sm:$0xff]
    %v133 = vld [vmem:[#allocation2 + $0x50] sm:$0xff]
    %v134 = vld [vmem:[#allocation2 + $0x58] sm:$0xff]
    %v135 = vld [vmem:[#allocation2 + $0x60] sm:$0xff]
    %v136 = vld [vmem:[#allocation2 + $0x68] sm:$0xff]
    %v137 = vld [vmem:[#allocation2 + $0x70] sm:$0xff]
    %v138 = vld [vmem:[#allocation2 + $0x78] sm:$0xff]
    %v139 = vld [vmem:[#allocation2 + $0x80] sm:$0xff]
    %v140 = vld [vmem:[#allocation2 + $0x88] sm:$0xff]
    %v141 = vld [vmem:[#allocation2 + $0x90] sm:$0xff]
    %v142 = vld [vmem:[#allocation2 + $0x98] sm:$0xff]
    %v143 = vld [vmem:[#allocation2 + $0xa0] sm:$0xff]
    %v144 = vld [vmem:[#allocation2 + $0xa8] sm:$0xff]
    %v145 = vld [vmem:[#allocation2 + $0xb0] sm:$0xff]
    %v146 = vld [vmem:[#allocation2 + $0xb8] sm:$0xff]
    %v147 = vld [vmem:[#allocation2 + $0xc0] sm:$0xff]
    %v148 = vld [vmem:[#allocation2 + $0xc8] sm:$0xff]
    %v149 = vld [vmem:[#allocation2 + $0xd0] sm:$0xff]
    %v150 = vld [vmem:[#allocation2 + $0xd8] sm:$0xff]
    %v151 = vld [vmem:[#allocation2 + $0xe0] sm:$0xff]
    %v152 = vld [vmem:[#allocation2 + $0xe8] sm:$0xff]
    %v153 = vld [vmem:[#allocation2 + $0xf0] sm:$0xff]
    %v154 = vld [vmem:[#allocation2 + $0xf8] sm:$0xff]
    %155 = vmatprep.subr.mxu0 %v124
    %156 = vmatpush1.msra.mxu0 %v123
    %157 = vmatprep.subr.mxu0 %v126
    %158 = vmatpush1.msra.mxu0 %v125
    %159 = vmatprep.subr.mxu0 %v128
    %160 = vmatpush1.msra.mxu0 %v127
    %161 = vmatprep.subr.mxu0 %v130
    %162 = vmatpush1.msra.mxu0 %v129
    %163 = vmatprep.subr.mxu0 %v132
    %164 = vmatpush1.msra.mxu0 %v131
    %165 = vmatprep.subr.mxu0 %v134
    %166 = vmatpush1.msra.mxu0 %v133
    %167 = vmatprep.subr.mxu0 %v136
    %168 = vmatpush1.msra.mxu0 %v135
    %169 = vmatprep.subr.mxu0 %v138
    %170 = vmatpush1.msra.mxu0 %v137
    %171 = vmatprep.subr.mxu0 %v140
    %172 = vmatpush1.msra.mxu0 %v139
    %173 = vmatprep.subr.mxu0 %v142
    %174 = vmatpush1.msra.mxu0 %v141
    %175 = vmatprep.subr.mxu0 %v144
    %176 = vmatpush1.msra.mxu0 %v143
    %177 = vmatprep.subr.mxu0 %v146
    %178 = vmatpush1.msra.mxu0 %v145
    %179 = vmatprep.subr.mxu0 %v148
    %180 = vmatpush1.msra.mxu0 %v147
    %181 = vmatprep.subr.mxu0 %v150
    %182 = vmatpush1.msra.mxu0 %v149
    %183 = vmatprep.subr.mxu0 %v152
    %184 = vmatpush1.msra.mxu0 %v151
    %185 = vmatprep.subr.mxu0 %v154
    %186 = vmatpush1.msra.mxu0 %v153
    %187 = vmatprep.subr.mxu0 0.0
    %188 = vmatpush1.msra.mxu0 0.0
    %189 = vmatprep.subr.mxu0 0.0
    %190 = vmatpush1.msra.mxu0 0.0
    %191 = vmatprep.subr.mxu0 0.0
    %192 = vmatpush1.msra.mxu0 0.0
    %193 = vmatprep.subr.mxu0 0.0
    %194 = vmatpush1.msra.mxu0 0.0
    %195 = vmatprep.subr.mxu0 0.0
    %196 = vmatpush1.msra.mxu0 0.0
    %197 = vmatprep.subr.mxu0 0.0
    %198 = vmatpush1.msra.mxu0 0.0
    %199 = vmatprep.subr.mxu0 0.0
    %200 = vmatpush1.msra.mxu0 0.0
    %201 = vmatprep.subr.mxu0 0.0
    %202 = vmatpush1.msra.mxu0 0.0
    %203 = vmatprep.subr.mxu0 0.0
    %204 = vmatpush1.msra.mxu0 0.0
    %205 = vmatprep.subr.mxu0 0.0
    %206 = vmatpush1.msra.mxu0 0.0
    %207 = vmatprep.subr.mxu0 0.0
    %208 = vmatpush1.msra.mxu0 0.0
    %209 = vmatprep.subr.mxu0 0.0
    %210 = vmatpush1.msra.mxu0 0.0
    %211 = vmatprep.subr.mxu0 0.0
    %212 = vmatpush1.msra.mxu0 0.0
    %213 = vmatprep.subr.mxu0 0.0
    %214 = vmatpush1.msra.mxu0 0.0
    %215 = vmatprep.subr.mxu0 0.0
    %216 = vmatpush1.msra.mxu0 0.0
    %217 = vmatprep.subr.mxu0 0.0
    %218 = vmatpush1.msra.mxu0 0.0
    %219 = vmatprep.mubr.f32.mxu0 0.0
    %220 = vmatmul.mubr.f32.gmra.mrb[0].mxu0 %v115
    %v221 = vpop.f32.mrb[0].mxu0
    %v222 = vadd.f32 0.0, %v221
    %v223 = vpop.f32.mrb[0].mxu0
    %v224 = vadd.f32 0.0, %v223
    %225 = vmatprep.mubr.f32.mxu0 0.0
    %226 = vmatmul.mubr.f32.gmra.mrb[0].mxu0 %v116
    %v227 = vpop.f32.mrb[0].mxu0
    %v228 = vadd.f32 0.0, %v227
    %v229 = vpop.f32.mrb[0].mxu0
    %v230 = vadd.f32 0.0, %v229
    %231 = vmatprep.mubr.f32.mxu0 0.0
    %232 = vmatmul.mubr.f32.gmra.mrb[0].mxu0 %v117
    %v233 = vpop.f32.mrb[0].mxu0
    %v234 = vadd.f32 0.0, %v233
    %v235 = vpop.f32.mrb[0].mxu0
    %v236 = vadd.f32 0.0, %v235
    %237 = vmatprep.mubr.f32.mxu0 0.0
    %238 = vmatmul.mubr.f32.gmra.mrb[0].mxu0 %v118
    %v239 = vpop.f32.mrb[0].mxu0
    %v240 = vadd.f32 0.0, %v239
    %v241 = vpop.f32.mrb[0].mxu0
    %v242 = vadd.f32 0.0, %v241
    %243 = vmatprep.mubr.f32.mxu0 0.0
    %244 = vmatmul.mubr.f32.gmra.mrb[0].mxu0 %v119
    %v245 = vpop.f32.mrb[0].mxu0
    %v246 = vadd.f32 0.0, %v245
    %v247 = vpop.f32.mrb[0].mxu0
    %v248 = vadd.f32 0.0, %v247
    %249 = vmatprep.mubr.f32.mxu0 0.0
    %250 = vmatmul.mubr.f32.gmra.mrb[0].mxu0 %v120
    %v251 = vpop.f32.mrb[0].mxu0
    %v252 = vadd.f32 0.0, %v251
    %v253 = vpop.f32.mrb[0].mxu0
    %v254 = vadd.f32 0.0, %v253
    %255 = vmatprep.mubr.f32.mxu0 0.0
    %256 = vmatmul.mubr.f32.gmra.mrb[0].mxu0 %v121
    %v257 = vpop.f32.mrb[0].mxu0
    %v258 = vadd.f32 0.0, %v257
    %v259 = vpop.f32.mrb[0].mxu0
    %v260 = vadd.f32 0.0, %v259
    %261 = vmatprep.mubr.f32.mxu0 0.0
    %262 = vmatmul.mubr.f32.gmra.mrb[0].mxu0 %v122
    %v263 = vpop.f32.mrb[0].mxu0
    %v264 = vadd.f32 0.0, %v263
    %v265 = vpop.f32.mrb[0].mxu0
    %v266 = vadd.f32 0.0, %v265
    %267 = vdwg.mxu0
    %v268 = vld [vmem:[#allocation2 + $0x100] sm:$0xff]
    %v269 = vld [vmem:[#allocation2 + $0x108] sm:$0xff]
    %v270 = vld [vmem:[#allocation2 + $0x110] sm:$0xff]
    %v271 = vld [vmem:[#allocation2 + $0x118] sm:$0xff]
    %v272 = vld [vmem:[#allocation2 + $0x120] sm:$0xff]
    %v273 = vld [vmem:[#allocation2 + $0x128] sm:$0xff]
    %v274 = vld [vmem:[#allocation2 + $0x130] sm:$0xff]
    %v275 = vld [vmem:[#allocation2 + $0x138] sm:$0xff]
    %v276 = vld [vmem:[#allocation2 + $0x140] sm:$0xff]
    %v277 = vld [vmem:[#allocation2 + $0x148] sm:$0xff]
    %v278 = vld [vmem:[#allocation2 + $0x150] sm:$0xff]
    %v279 = vld [vmem:[#allocation2 + $0x158] sm:$0xff]
    %v280 = vld [vmem:[#allocation2 + $0x160] sm:$0xff]
    %v281 = vld [vmem:[#allocation2 + $0x168] sm:$0xff]
    %v282 = vld [vmem:[#allocation2 + $0x170] sm:$0xff]
    %v283 = vld [vmem:[#allocation2 + $0x178] sm:$0xff]
    %vm284 = vcmask 523264
    %v286 = vsel %vm284, 0.0, 0
    %288 = vmatprep.subr.mxu0 %v269
    %289 = vmatpush1.msra.mxu0 %v268
    %290 = vmatprep.subr.mxu0 %v271
    %291 = vmatpush1.msra.mxu0 %v270
    %292 = vmatprep.subr.mxu0 %v273
    %293 = vmatpush1.msra.mxu0 %v272
    %294 = vmatprep.subr.mxu0 %v275
    %295 = vmatpush1.msra.mxu0 %v274
    %296 = vmatprep.subr.mxu0 %v277
    %297 = vmatpush1.msra.mxu0 %v276
    %298 = vmatprep.subr.mxu0 %v279
    %299 = vmatpush1.msra.mxu0 %v278
    %300 = vmatprep.subr.mxu0 %v281
    %301 = vmatpush1.msra.mxu0 %v280
    %302 = vmatprep.subr.mxu0 %v283
    %303 = vmatpush1.msra.mxu0 %v282
    %304 = vmatprep.subr.mxu0 0.0
    %305 = vmatpush1.msra.mxu0 0.0
    %306 = vmatprep.subr.mxu0 0.0
    %307 = vmatpush1.msra.mxu0 0.0
    %308 = vmatprep.subr.mxu0 0.0
    %309 = vmatpush1.msra.mxu0 0.0
    %310 = vmatprep.subr.mxu0 0.0
    %311 = vmatpush1.msra.mxu0 0.0
    %312 = vmatprep.subr.mxu0 0.0
    %313 = vmatpush1.msra.mxu0 0.0
    %314 = vmatprep.subr.mxu0 0.0
    %315 = vmatpush1.msra.mxu0 0.0
    %316 = vmatprep.subr.mxu0 0.0
    %317 = vmatpush1.msra.mxu0 0.0
    %318 = vmatprep.subr.mxu0 0.0
    %319 = vmatpush1.msra.mxu0 0.0
    %320 = vmatprep.subr.mxu0 0.0
    %321 = vmatpush1.msra.mxu0 0.0
    %322 = vmatprep.subr.mxu0 0.0
    %323 = vmatpush1.msra.mxu0 0.0
    %324 = vmatprep.subr.mxu0 0.0
    %325 = vmatpush1.msra.mxu0 0.0
    %326 = vmatprep.subr.mxu0 0.0
    %327 = vmatpush1.msra.mxu0 0.0
    %328 = vmatprep.subr.mxu0 0.0
    %329 = vmatpush1.msra.mxu0 0.0
    %330 = vmatprep.subr.mxu0 0.0
    %331 = vmatpush1.msra.mxu0 0.0
    %332 = vmatprep.subr.mxu0 0.0
    %333 = vmatpush1.msra.mxu0 0.0
    %334 = vmatprep.subr.mxu0 0.0
    %335 = vmatpush1.msra.mxu0 0.0
    %336 = vmatprep.subr.mxu0 0.0
    %337 = vmatpush1.msra.mxu0 0.0
    %338 = vmatprep.subr.mxu0 0.0
    %339 = vmatpush1.msra.mxu0 0.0
    %340 = vmatprep.subr.mxu0 0.0
    %341 = vmatpush1.msra.mxu0 0.0
    %342 = vmatprep.subr.mxu0 0.0
    %343 = vmatpush1.msra.mxu0 0.0
    %344 = vmatprep.subr.mxu0 0.0
    %345 = vmatpush1.msra.mxu0 0.0
    %346 = vmatprep.subr.mxu0 0.0
    %347 = vmatpush1.msra.mxu0 0.0
    %348 = vmatprep.subr.mxu0 0.0
    %349 = vmatpush1.msra.mxu0 0.0
    %350 = vmatprep.subr.mxu0 0.0
    %351 = vmatpush1.msra.mxu0 0.0
    %352 = vmatprep.mubr.f32.mxu0 0.0
    %353 = vmatmul.mubr.f32.gmra.mrb[0].mxu0 %v286
    %v354 = vpop.f32.mrb[0].mxu0
    %v355 = vadd.f32 0.0, %v354
    %v356 = vpop.f32.mrb[0].mxu0
    %v357 = vadd.f32 0.0, %v356
    %358 = vdwg.mxu0
    %v359 = vadd.f32 %v222, %v355
    %v360 = vadd.f32 %v224, %v357
    %v361 = vxor.u32 %v359, 2147483648
    %v362 = vxor.u32 %v360, 2147483648
    %v363 = vmul.f32 %v361, 1.442695
    %v364 = vpow.pop %v363
    %v365 = vmul.f32 %v362, 1.442695
    %v366 = vpow.pop %v365
    %v367 = vadd.f32 %v364, 1.0
    %v368 = vadd.f32 %v366, 1.0
    %v369 = vrcp.pop %v367
    %v370 = vmul.f32 1.0, %v369
    %v371 = vrcp.pop %v368
    %v372 = vmul.f32 1.0, %v371
    %v373 = vtanh.pop %v360
    %v374 = vmul.f32 %v370, 0.0
    %v375 = vmul.f32 %v370, %v373
    %377 = vrot.lane.b32.xlu0 %v375, 64
    %v378 = vpop.permute.xlu0 %377
    %v380 = vadd.f32 %v374, %v378
    %v381 = vtanh.pop %v380
    %v382 = vmul.f32 %v372, %v381
    %384 = vrot.lane.b32.xlu0 %v382, 64
    %v385 = vpop.permute.xlu0 %384
    %v386 = vsel %vm284, %v385, 0
    %388 = vmatprep.subr.mxu0 %v269
    %389 = vmatpush1.msra.mxu0 %v268
    %390 = vmatprep.subr.mxu0 %v271
    %391 = vmatpush1.msra.mxu0 %v270
    %392 = vmatprep.subr.mxu0 %v273
    %393 = vmatpush1.msra.mxu0 %v272
    %394 = vmatprep.subr.mxu0 %v275
    %395 = vmatpush1.msra.mxu0 %v274
    %396 = vmatprep.subr.mxu0 %v277
    %397 = vmatpush1.msra.mxu0 %v276
    %398 = vmatprep.subr.mxu0 %v279
    %399 = vmatpush1.msra.mxu0 %v278
    %400 = vmatprep.subr.mxu0 %v281
    %401 = vmatpush1.msra.mxu0 %v280
    %402 = vmatprep.subr.mxu0 %v283
    %403 = vmatpush1.msra.mxu0 %v282
    %404 = vmatprep.subr.mxu0 0.0
    %405 = vmatpush1.msra.mxu0 0.0
    %406 = vmatprep.subr.mxu0 0.0
    %407 = vmatpush1.msra.mxu0 0.0
    %408 = vmatprep.subr.mxu0 0.0
    %409 = vmatpush1.msra.mxu0 0.0
    %410 = vmatprep.subr.mxu0 0.0
    %411 = vmatpush1.msra.mxu0 0.0
    %412 = vmatprep.subr.mxu0 0.0
    %413 = vmatpush1.msra.mxu0 0.0
    %414 = vmatprep.subr.mxu0 0.0
    %415 = vmatpush1.msra.mxu0 0.0
    %416 = vmatprep.subr.mxu0 0.0
    %417 = vmatpush1.msra.mxu0 0.0
    %418 = vmatprep.subr.mxu0 0.0
    %419 = vmatpush1.msra.mxu0 0.0
    %420 = vmatprep.subr.mxu0 0.0
    %421 = vmatpush1.msra.mxu0 0.0
    %422 = vmatprep.subr.mxu0 0.0
    %423 = vmatpush1.msra.mxu0 0.0
    %424 = vmatprep.subr.mxu0 0.0
    %425 = vmatpush1.msra.mxu0 0.0
    %426 = vmatprep.subr.mxu0 0.0
    %427 = vmatpush1.msra.mxu0 0.0
    %428 = vmatprep.subr.mxu0 0.0
    %429 = vmatpush1.msra.mxu0 0.0
    %430 = vmatprep.subr.mxu0 0.0
    %431 = vmatpush1.msra.mxu0 0.0
    %432 = vmatprep.subr.mxu0 0.0
    %433 = vmatpush1.msra.mxu0 0.0
    %434 = vmatprep.subr.mxu0 0.0
    %435 = vmatpush1.msra.mxu0 0.0
    %436 = vmatprep.subr.mxu0 0.0
    %437 = vmatpush1.msra.mxu0 0.0
    %438 = vmatprep.subr.mxu0 0.0
    %439 = vmatpush1.msra.mxu0 0.0
    %440 = vmatprep.subr.mxu0 0.0
    %441 = vmatpush1.msra.mxu0 0.0
    %442 = vmatprep.subr.mxu0 0.0
    %443 = vmatpush1.msra.mxu0 0.0
    %444 = vmatprep.subr.mxu0 0.0
    %445 = vmatpush1.msra.mxu0 0.0
    %446 = vmatprep.subr.mxu0 0.0
    %447 = vmatpush1.msra.mxu0 0.0
    %448 = vmatprep.subr.mxu0 0.0
    %449 = vmatpush1.msra.mxu0 0.0
    %450 = vmatprep.subr.mxu0 0.0
    %451 = vmatpush1.msra.mxu0 0.0
    %452 = vmatprep.mubr.f32.mxu0 0.0
    %453 = vmatmul.mubr.f32.gmra.mrb[0].mxu0 %v386
    %v454 = vpop.f32.mrb[0].mxu0
    %v455 = vadd.f32 0.0, %v454
    %v456 = vpop.f32.mrb[0].mxu0
    %v457 = vadd.f32 0.0, %v456
    %458 = vdwg.mxu0
    %v459 = vadd.f32 %v228, %v455
    %v460 = vadd.f32 %v230, %v457
    %v461 = vxor.u32 %v459, 2147483648
    %v462 = vxor.u32 %v460, 2147483648
    %v463 = vmul.f32 %v461, 1.442695
    %v464 = vpow.pop %v463
    %v465 = vmul.f32 %v462, 1.442695
    %v466 = vpow.pop %v465
    %v467 = vadd.f32 %v464, 1.0
    %v468 = vadd.f32 %v466, 1.0
    %v469 = vrcp.pop %v467
    %v470 = vmul.f32 1.0, %v469
    %v471 = vrcp.pop %v468
    %v472 = vmul.f32 1.0, %v471
    %v473 = vtanh.pop %v460
    %v474 = vmul.f32 %v470, %v380
    %v475 = vmul.f32 %v470, %v473
    %477 = vrot.lane.b32.xlu0 %v475, 64
    %v478 = vpop.permute.xlu0 %477
    %v480 = vadd.f32 %v474, %v478
    %v481 = vtanh.pop %v480
    %v482 = vmul.f32 %v472, %v481
    %484 = vrot.lane.b32.xlu0 %v482, 64
    %v485 = vpop.permute.xlu0 %484
    %v486 = vsel %vm284, %v485, 0
    %488 = vmatprep.subr.mxu0 %v269
    %489 = vmatpush1.msra.mxu0 %v268
    %490 = vmatprep.subr.mxu0 %v271
    %491 = vmatpush1.msra.mxu0 %v270
    %492 = vmatprep.subr.mxu0 %v273
    %493 = vmatpush1.msra.mxu0 %v272
    %494 = vmatprep.subr.mxu0 %v275
    %495 = vmatpush1.msra.mxu0 %v274
    %496 = vmatprep.subr.mxu0 %v277
    %497 = vmatpush1.msra.mxu0 %v276
    %498 = vmatprep.subr.mxu0 %v279
    %499 = vmatpush1.msra.mxu0 %v278
    %500 = vmatprep.subr.mxu0 %v281
    %501 = vmatpush1.msra.mxu0 %v280
    %502 = vmatprep.subr.mxu0 %v283
    %503 = vmatpush1.msra.mxu0 %v282
    %504 = vmatprep.subr.mxu0 0.0
    %505 = vmatpush1.msra.mxu0 0.0
    %506 = vmatprep.subr.mxu0 0.0
    %507 = vmatpush1.msra.mxu0 0.0
    %508 = vmatprep.subr.mxu0 0.0
    %509 = vmatpush1.msra.mxu0 0.0
    %510 = vmatprep.subr.mxu0 0.0
    %511 = vmatpush1.msra.mxu0 0.0
    %512 = vmatprep.subr.mxu0 0.0
    %513 = vmatpush1.msra.mxu0 0.0
    %514 = vmatprep.subr.mxu0 0.0
    %515 = vmatpush1.msra.mxu0 0.0
    %516 = vmatprep.subr.mxu0 0.0
    %517 = vmatpush1.msra.mxu0 0.0
    %518 = vmatprep.subr.mxu0 0.0
    %519 = vmatpush1.msra.mxu0 0.0
    %520 = vmatprep.subr.mxu0 0.0
    %521 = vmatpush1.msra.mxu0 0.0
    %522 = vmatprep.subr.mxu0 0.0
    %523 = vmatpush1.msra.mxu0 0.0
    %524 = vmatprep.subr.mxu0 0.0
    %525 = vmatpush1.msra.mxu0 0.0
    %526 = vmatprep.subr.mxu0 0.0
    %527 = vmatpush1.msra.mxu0 0.0
    %528 = vmatprep.subr.mxu0 0.0
    %529 = vmatpush1.msra.mxu0 0.0
    %530 = vmatprep.subr.mxu0 0.0
    %531 = vmatpush1.msra.mxu0 0.0
    %532 = vmatprep.subr.mxu0 0.0
    %533 = vmatpush1.msra.mxu0 0.0
    %534 = vmatprep.subr.mxu0 0.0
    %535 = vmatpush1.msra.mxu0 0.0
    %536 = vmatprep.subr.mxu0 0.0
    %537 = vmatpush1.msra.mxu0 0.0
    %538 = vmatprep.subr.mxu0 0.0
    %539 = vmatpush1.msra.mxu0 0.0
    %540 = vmatprep.subr.mxu0 0.0
    %541 = vmatpush1.msra.mxu0 0.0
    %542 = vmatprep.subr.mxu0 0.0
    %543 = vmatpush1.msra.mxu0 0.0
    %544 = vmatprep.subr.mxu0 0.0
    %545 = vmatpush1.msra.mxu0 0.0
    %546 = vmatprep.subr.mxu0 0.0
    %547 = vmatpush1.msra.mxu0 0.0
    %548 = vmatprep.subr.mxu0 0.0
    %549 = vmatpush1.msra.mxu0 0.0
    %550 = vmatprep.subr.mxu0 0.0
    %551 = vmatpush1.msra.mxu0 0.0
    %552 = vmatprep.mubr.f32.mxu0 0.0
    %553 = vmatmul.mubr.f32.gmra.mrb[0].mxu0 %v486
    %v554 = vpop.f32.mrb[0].mxu0
    %v555 = vadd.f32 0.0, %v554
    %v556 = vpop.f32.mrb[0].mxu0
    %v557 = vadd.f32 0.0, %v556
    %558 = vdwg.mxu0
    %v559 = vadd.f32 %v234, %v555
    %v560 = vadd.f32 %v236, %v557
    %v561 = vxor.u32 %v559, 2147483648
    %v562 = vxor.u32 %v560, 2147483648
    %v563 = vmul.f32 %v561, 1.442695
    %v564 = vpow.pop %v563
    %v565 = vmul.f32 %v562, 1.442695
    %v566 = vpow.pop %v565
    %v567 = vadd.f32 %v564, 1.0
    %v568 = vadd.f32 %v566, 1.0
    %v569 = vrcp.pop %v567
    %v570 = vmul.f32 1.0, %v569
    %v571 = vrcp.pop %v568
    %v572 = vmul.f32 1.0, %v571
    %v573 = vtanh.pop %v560
    %v574 = vmul.f32 %v570, %v480
    %v575 = vmul.f32 %v570, %v573
    %577 = vrot.lane.b32.xlu0 %v575, 64
    %v578 = vpop.permute.xlu0 %577
    %v580 = vadd.f32 %v574, %v578
    %v581 = vtanh.pop %v580
    %v582 = vmul.f32 %v572, %v581
    %584 = vrot.lane.b32.xlu0 %v582, 64
    %v585 = vpop.permute.xlu0 %584
    %v586 = vsel %vm284, %v585, 0
    %588 = vmatprep.subr.mxu0 %v269
    %589 = vmatpush1.msra.mxu0 %v268
    %590 = vmatprep.subr.mxu0 %v271
    %591 = vmatpush1.msra.mxu0 %v270
    %592 = vmatprep.subr.mxu0 %v273
    %593 = vmatpush1.msra.mxu0 %v272
    %594 = vmatprep.subr.mxu0 %v275
    %595 = vmatpush1.msra.mxu0 %v274
    %596 = vmatprep.subr.mxu0 %v277
    %597 = vmatpush1.msra.mxu0 %v276
    %598 = vmatprep.subr.mxu0 %v279
    %599 = vmatpush1.msra.mxu0 %v278
    %600 = vmatprep.subr.mxu0 %v281
    %601 = vmatpush1.msra.mxu0 %v280
    %602 = vmatprep.subr.mxu0 %v283
    %603 = vmatpush1.msra.mxu0 %v282
    %604 = vmatprep.subr.mxu0 0.0
    %605 = vmatpush1.msra.mxu0 0.0
    %606 = vmatprep.subr.mxu0 0.0
    %607 = vmatpush1.msra.mxu0 0.0
    %608 = vmatprep.subr.mxu0 0.0
    %609 = vmatpush1.msra.mxu0 0.0
    %610 = vmatprep.subr.mxu0 0.0
    %611 = vmatpush1.msra.mxu0 0.0
    %612 = vmatprep.subr.mxu0 0.0
    %613 = vmatpush1.msra.mxu0 0.0
    %614 = vmatprep.subr.mxu0 0.0
    %615 = vmatpush1.msra.mxu0 0.0
    %616 = vmatprep.subr.mxu0 0.0
    %617 = vmatpush1.msra.mxu0 0.0
    %618 = vmatprep.subr.mxu0 0.0
    %619 = vmatpush1.msra.mxu0 0.0
    %620 = vmatprep.subr.mxu0 0.0
    %621 = vmatpush1.msra.mxu0 0.0
    %622 = vmatprep.subr.mxu0 0.0
    %623 = vmatpush1.msra.mxu0 0.0
    %624 = vmatprep.subr.mxu0 0.0
    %625 = vmatpush1.msra.mxu0 0.0
    %626 = vmatprep.subr.mxu0 0.0
    %627 = vmatpush1.msra.mxu0 0.0
    %628 = vmatprep.subr.mxu0 0.0
    %629 = vmatpush1.msra.mxu0 0.0
    %630 = vmatprep.subr.mxu0 0.0
    %631 = vmatpush1.msra.mxu0 0.0
    %632 = vmatprep.subr.mxu0 0.0
    %633 = vmatpush1.msra.mxu0 0.0
    %634 = vmatprep.subr.mxu0 0.0
    %635 = vmatpush1.msra.mxu0 0.0
    %636 = vmatprep.subr.mxu0 0.0
    %637 = vmatpush1.msra.mxu0 0.0
    %638 = vmatprep.subr.mxu0 0.0
    %639 = vmatpush1.msra.mxu0 0.0
    %640 = vmatprep.subr.mxu0 0.0
    %641 = vmatpush1.msra.mxu0 0.0
    %642 = vmatprep.subr.mxu0 0.0
    %643 = vmatpush1.msra.mxu0 0.0
    %644 = vmatprep.subr.mxu0 0.0
    %645 = vmatpush1.msra.mxu0 0.0
    %646 = vmatprep.subr.mxu0 0.0
    %647 = vmatpush1.msra.mxu0 0.0
    %648 = vmatprep.subr.mxu0 0.0
    %649 = vmatpush1.msra.mxu0 0.0
    %650 = vmatprep.subr.mxu0 0.0
    %651 = vmatpush1.msra.mxu0 0.0
    %652 = vmatprep.mubr.f32.mxu0 0.0
    %653 = vmatmul.mubr.f32.gmra.mrb[0].mxu0 %v586
    %v654 = vpop.f32.mrb[0].mxu0
    %v655 = vadd.f32 0.0, %v654
    %v656 = vpop.f32.mrb[0].mxu0
    %v657 = vadd.f32 0.0, %v656
    %658 = vdwg.mxu0
    %v659 = vadd.f32 %v240, %v655
    %v660 = vadd.f32 %v242, %v657
    %v661 = vxor.u32 %v659, 2147483648
    %v662 = vxor.u32 %v660, 2147483648
    %v663 = vmul.f32 %v661, 1.442695
    %v664 = vpow.pop %v663
    %v665 = vmul.f32 %v662, 1.442695
    %v666 = vpow.pop %v665
    %v667 = vadd.f32 %v664, 1.0
    %v668 = vadd.f32 %v666, 1.0
    %v669 = vrcp.pop %v667
    %v670 = vmul.f32 1.0, %v669
    %v671 = vrcp.pop %v668
    %v672 = vmul.f32 1.0, %v671
    %v673 = vtanh.pop %v660
    %v674 = vmul.f32 %v670, %v580
    %v675 = vmul.f32 %v670, %v673
    %677 = vrot.lane.b32.xlu0 %v675, 64
    %v678 = vpop.permute.xlu0 %677
    %v680 = vadd.f32 %v674, %v678
    %v681 = vtanh.pop %v680
    %v682 = vmul.f32 %v672, %v681
    %684 = vrot.lane.b32.xlu0 %v682, 64
    %v685 = vpop.permute.xlu0 %684
    %v686 = vsel %vm284, %v685, 0
    %688 = vmatprep.subr.mxu0 %v269
    %689 = vmatpush1.msra.mxu0 %v268
    %690 = vmatprep.subr.mxu0 %v271
    %691 = vmatpush1.msra.mxu0 %v270
    %692 = vmatprep.subr.mxu0 %v273
    %693 = vmatpush1.msra.mxu0 %v272
    %694 = vmatprep.subr.mxu0 %v275
    %695 = vmatpush1.msra.mxu0 %v274
    %696 = vmatprep.subr.mxu0 %v277
    %697 = vmatpush1.msra.mxu0 %v276
    %698 = vmatprep.subr.mxu0 %v279
    %699 = vmatpush1.msra.mxu0 %v278
    %700 = vmatprep.subr.mxu0 %v281
    %701 = vmatpush1.msra.mxu0 %v280
    %702 = vmatprep.subr.mxu0 %v283
    %703 = vmatpush1.msra.mxu0 %v282
    %704 = vmatprep.subr.mxu0 0.0
    %705 = vmatpush1.msra.mxu0 0.0
    %706 = vmatprep.subr.mxu0 0.0
    %707 = vmatpush1.msra.mxu0 0.0
    %708 = vmatprep.subr.mxu0 0.0
    %709 = vmatpush1.msra.mxu0 0.0
    %710 = vmatprep.subr.mxu0 0.0
    %711 = vmatpush1.msra.mxu0 0.0
    %712 = vmatprep.subr.mxu0 0.0
    %713 = vmatpush1.msra.mxu0 0.0
    %714 = vmatprep.subr.mxu0 0.0
    %715 = vmatpush1.msra.mxu0 0.0
    %716 = vmatprep.subr.mxu0 0.0
    %717 = vmatpush1.msra.mxu0 0.0
    %718 = vmatprep.subr.mxu0 0.0
    %719 = vmatpush1.msra.mxu0 0.0
    %720 = vmatprep.subr.mxu0 0.0
    %721 = vmatpush1.msra.mxu0 0.0
    %722 = vmatprep.subr.mxu0 0.0
    %723 = vmatpush1.msra.mxu0 0.0
    %724 = vmatprep.subr.mxu0 0.0
    %725 = vmatpush1.msra.mxu0 0.0
    %726 = vmatprep.subr.mxu0 0.0
    %727 = vmatpush1.msra.mxu0 0.0
    %728 = vmatprep.subr.mxu0 0.0
    %729 = vmatpush1.msra.mxu0 0.0
    %730 = vmatprep.subr.mxu0 0.0
    %731 = vmatpush1.msra.mxu0 0.0
    %732 = vmatprep.subr.mxu0 0.0
    %733 = vmatpush1.msra.mxu0 0.0
    %734 = vmatprep.subr.mxu0 0.0
    %735 = vmatpush1.msra.mxu0 0.0
    %736 = vmatprep.subr.mxu0 0.0
    %737 = vmatpush1.msra.mxu0 0.0
    %738 = vmatprep.subr.mxu0 0.0
    %739 = vmatpush1.msra.mxu0 0.0
    %740 = vmatprep.subr.mxu0 0.0
    %741 = vmatpush1.msra.mxu0 0.0
    %742 = vmatprep.subr.mxu0 0.0
    %743 = vmatpush1.msra.mxu0 0.0
    %744 = vmatprep.subr.mxu0 0.0
    %745 = vmatpush1.msra.mxu0 0.0
    %746 = vmatprep.subr.mxu0 0.0
    %747 = vmatpush1.msra.mxu0 0.0
    %748 = vmatprep.subr.mxu0 0.0
    %749 = vmatpush1.msra.mxu0 0.0
    %750 = vmatprep.subr.mxu0 0.0
    %751 = vmatpush1.msra.mxu0 0.0
    %752 = vmatprep.mubr.f32.mxu0 0.0
    %753 = vmatmul.mubr.f32.gmra.mrb[0].mxu0 %v686
    %v754 = vpop.f32.mrb[0].mxu0
    %v755 = vadd.f32 0.0, %v754
    %v756 = vpop.f32.mrb[0].mxu0
    %v757 = vadd.f32 0.0, %v756
    %758 = vdwg.mxu0
    %v759 = vadd.f32 %v246, %v755
    %v760 = vadd.f32 %v248, %v757
    %v761 = vxor.u32 %v759, 2147483648
    %v762 = vxor.u32 %v760, 2147483648
    %v763 = vmul.f32 %v761, 1.442695
    %v764 = vpow.pop %v763
    %v765 = vmul.f32 %v762, 1.442695
    %v766 = vpow.pop %v765
    %v767 = vadd.f32 %v764, 1.0
    %v768 = vadd.f32 %v766, 1.0
    %v769 = vrcp.pop %v767
    %v770 = vmul.f32 1.0, %v769
    %v771 = vrcp.pop %v768
    %v772 = vmul.f32 1.0, %v771
    %v773 = vtanh.pop %v760
    %v774 = vmul.f32 %v770, %v680
    %v775 = vmul.f32 %v770, %v773
    %777 = vrot.lane.b32.xlu0 %v775, 64
    %v778 = vpop.permute.xlu0 %777
    %v780 = vadd.f32 %v774, %v778
    %v781 = vtanh.pop %v780
    %v782 = vmul.f32 %v772, %v781
    %784 = vrot.lane.b32.xlu0 %v782, 64
    %v785 = vpop.permute.xlu0 %784
    %v786 = vsel %vm284, %v785, 0
    %788 = vmatprep.subr.mxu0 %v269
    %789 = vmatpush1.msra.mxu0 %v268
    %790 = vmatprep.subr.mxu0 %v271
    %791 = vmatpush1.msra.mxu0 %v270
    %792 = vmatprep.subr.mxu0 %v273
    %793 = vmatpush1.msra.mxu0 %v272
    %794 = vmatprep.subr.mxu0 %v275
    %795 = vmatpush1.msra.mxu0 %v274
    %796 = vmatprep.subr.mxu0 %v277
    %797 = vmatpush1.msra.mxu0 %v276
    %798 = vmatprep.subr.mxu0 %v279
    %799 = vmatpush1.msra.mxu0 %v278
    %800 = vmatprep.subr.mxu0 %v281
    %801 = vmatpush1.msra.mxu0 %v280
    %802 = vmatprep.subr.mxu0 %v283
    %803 = vmatpush1.msra.mxu0 %v282
    %804 = vmatprep.subr.mxu0 0.0
    %805 = vmatpush1.msra.mxu0 0.0
    %806 = vmatprep.subr.mxu0 0.0
    %807 = vmatpush1.msra.mxu0 0.0
    %808 = vmatprep.subr.mxu0 0.0
    %809 = vmatpush1.msra.mxu0 0.0
    %810 = vmatprep.subr.mxu0 0.0
    %811 = vmatpush1.msra.mxu0 0.0
    %812 = vmatprep.subr.mxu0 0.0
    %813 = vmatpush1.msra.mxu0 0.0
    %814 = vmatprep.subr.mxu0 0.0
    %815 = vmatpush1.msra.mxu0 0.0
    %816 = vmatprep.subr.mxu0 0.0
    %817 = vmatpush1.msra.mxu0 0.0
    %818 = vmatprep.subr.mxu0 0.0
    %819 = vmatpush1.msra.mxu0 0.0
    %820 = vmatprep.subr.mxu0 0.0
    %821 = vmatpush1.msra.mxu0 0.0
    %822 = vmatprep.subr.mxu0 0.0
    %823 = vmatpush1.msra.mxu0 0.0
    %824 = vmatprep.subr.mxu0 0.0
    %825 = vmatpush1.msra.mxu0 0.0
    %826 = vmatprep.subr.mxu0 0.0
    %827 = vmatpush1.msra.mxu0 0.0
    %828 = vmatprep.subr.mxu0 0.0
    %829 = vmatpush1.msra.mxu0 0.0
    %830 = vmatprep.subr.mxu0 0.0
    %831 = vmatpush1.msra.mxu0 0.0
    %832 = vmatprep.subr.mxu0 0.0
    %833 = vmatpush1.msra.mxu0 0.0
    %834 = vmatprep.subr.mxu0 0.0
    %835 = vmatpush1.msra.mxu0 0.0
    %836 = vmatprep.subr.mxu0 0.0
    %837 = vmatpush1.msra.mxu0 0.0
    %838 = vmatprep.subr.mxu0 0.0
    %839 = vmatpush1.msra.mxu0 0.0
    %840 = vmatprep.subr.mxu0 0.0
    %841 = vmatpush1.msra.mxu0 0.0
    %842 = vmatprep.subr.mxu0 0.0
    %843 = vmatpush1.msra.mxu0 0.0
    %844 = vmatprep.subr.mxu0 0.0
    %845 = vmatpush1.msra.mxu0 0.0
    %846 = vmatprep.subr.mxu0 0.0
    %847 = vmatpush1.msra.mxu0 0.0
    %848 = vmatprep.subr.mxu0 0.0
    %849 = vmatpush1.msra.mxu0 0.0
    %850 = vmatprep.subr.mxu0 0.0
    %851 = vmatpush1.msra.mxu0 0.0
    %852 = vmatprep.mubr.f32.mxu0 0.0
    %853 = vmatmul.mubr.f32.gmra.mrb[0].mxu0 %v786
    %v854 = vpop.f32.mrb[0].mxu0
    %v855 = vadd.f32 0.0, %v854
    %v856 = vpop.f32.mrb[0].mxu0
    %v857 = vadd.f32 0.0, %v856
    %858 = vdwg.mxu0
    %v859 = vadd.f32 %v252, %v855
    %v860 = vadd.f32 %v254, %v857
    %v861 = vxor.u32 %v859, 2147483648
    %v862 = vxor.u32 %v860, 2147483648
    %v863 = vmul.f32 %v861, 1.442695
    %v864 = vpow.pop %v863
    %v865 = vmul.f32 %v862, 1.442695
    %v866 = vpow.pop %v865
    %v867 = vadd.f32 %v864, 1.0
    %v868 = vadd.f32 %v866, 1.0
    %v869 = vrcp.pop %v867
    %v870 = vmul.f32 1.0, %v869
    %v871 = vrcp.pop %v868
    %v872 = vmul.f32 1.0, %v871
    %v873 = vtanh.pop %v860
    %v874 = vmul.f32 %v870, %v780
    %v875 = vmul.f32 %v870, %v873
    %877 = vrot.lane.b32.xlu0 %v875, 64
    %v878 = vpop.permute.xlu0 %877
    %v880 = vadd.f32 %v874, %v878
    %v881 = vtanh.pop %v880
    %v882 = vmul.f32 %v872, %v881
    %884 = vrot.lane.b32.xlu0 %v882, 64
    %v885 = vpop.permute.xlu0 %884
    %v886 = vsel %vm284, %v885, 0
    %888 = vmatprep.subr.mxu0 %v269
    %889 = vmatpush1.msra.mxu0 %v268
    %890 = vmatprep.subr.mxu0 %v271
    %891 = vmatpush1.msra.mxu0 %v270
    %892 = vmatprep.subr.mxu0 %v273
    %893 = vmatpush1.msra.mxu0 %v272
    %894 = vmatprep.subr.mxu0 %v275
    %895 = vmatpush1.msra.mxu0 %v274
    %896 = vmatprep.subr.mxu0 %v277
    %897 = vmatpush1.msra.mxu0 %v276
    %898 = vmatprep.subr.mxu0 %v279
    %899 = vmatpush1.msra.mxu0 %v278
    %900 = vmatprep.subr.mxu0 %v281
    %901 = vmatpush1.msra.mxu0 %v280
    %902 = vmatprep.subr.mxu0 %v283
    %903 = vmatpush1.msra.mxu0 %v282
    %904 = vmatprep.subr.mxu0 0.0
    %905 = vmatpush1.msra.mxu0 0.0
    %906 = vmatprep.subr.mxu0 0.0
    %907 = vmatpush1.msra.mxu0 0.0
    %908 = vmatprep.subr.mxu0 0.0
    %909 = vmatpush1.msra.mxu0 0.0
    %910 = vmatprep.subr.mxu0 0.0
    %911 = vmatpush1.msra.mxu0 0.0
    %912 = vmatprep.subr.mxu0 0.0
    %913 = vmatpush1.msra.mxu0 0.0
    %914 = vmatprep.subr.mxu0 0.0
    %915 = vmatpush1.msra.mxu0 0.0
    %916 = vmatprep.subr.mxu0 0.0
    %917 = vmatpush1.msra.mxu0 0.0
    %918 = vmatprep.subr.mxu0 0.0
    %919 = vmatpush1.msra.mxu0 0.0
    %920 = vmatprep.subr.mxu0 0.0
    %921 = vmatpush1.msra.mxu0 0.0
    %922 = vmatprep.subr.mxu0 0.0
    %923 = vmatpush1.msra.mxu0 0.0
    %924 = vmatprep.subr.mxu0 0.0
    %925 = vmatpush1.msra.mxu0 0.0
    %926 = vmatprep.subr.mxu0 0.0
    %927 = vmatpush1.msra.mxu0 0.0
    %928 = vmatprep.subr.mxu0 0.0
    %929 = vmatpush1.msra.mxu0 0.0
    %930 = vmatprep.subr.mxu0 0.0
    %931 = vmatpush1.msra.mxu0 0.0
    %932 = vmatprep.subr.mxu0 0.0
    %933 = vmatpush1.msra.mxu0 0.0
    %934 = vmatprep.subr.mxu0 0.0
    %935 = vmatpush1.msra.mxu0 0.0
    %936 = vmatprep.subr.mxu0 0.0
    %937 = vmatpush1.msra.mxu0 0.0
    %938 = vmatprep.subr.mxu0 0.0
    %939 = vmatpush1.msra.mxu0 0.0
    %940 = vmatprep.subr.mxu0 0.0
    %941 = vmatpush1.msra.mxu0 0.0
    %942 = vmatprep.subr.mxu0 0.0
    %943 = vmatpush1.msra.mxu0 0.0
    %944 = vmatprep.subr.mxu0 0.0
    %945 = vmatpush1.msra.mxu0 0.0
    %946 = vmatprep.subr.mxu0 0.0
    %947 = vmatpush1.msra.mxu0 0.0
    %948 = vmatprep.subr.mxu0 0.0
    %949 = vmatpush1.msra.mxu0 0.0
    %950 = vmatprep.subr.mxu0 0.0
    %951 = vmatpush1.msra.mxu0 0.0
    %952 = vmatprep.mubr.f32.mxu0 0.0
    %953 = vmatmul.mubr.f32.gmra.mrb[0].mxu0 %v886
    %v954 = vpop.f32.mrb[0].mxu0
    %v955 = vadd.f32 0.0, %v954
    %v956 = vpop.f32.mrb[0].mxu0
    %v957 = vadd.f32 0.0, %v956
    %958 = vdwg.mxu0
    %v959 = vadd.f32 %v258, %v955
    %v960 = vadd.f32 %v260, %v957
    %v961 = vxor.u32 %v959, 2147483648
    %v962 = vxor.u32 %v960, 2147483648
    %v963 = vmul.f32 %v961, 1.442695
    %v964 = vpow.pop %v963
    %v965 = vmul.f32 %v962, 1.442695
    %v966 = vpow.pop %v965
    %v967 = vadd.f32 %v964, 1.0
    %v968 = vadd.f32 %v966, 1.0
    %v969 = vrcp.pop %v967
    %v970 = vmul.f32 1.0, %v969
    %v971 = vrcp.pop %v968
    %v972 = vmul.f32 1.0, %v971
    %v973 = vtanh.pop %v960
    %v974 = vmul.f32 %v970, %v880
    %v975 = vmul.f32 %v970, %v973
    %977 = vrot.lane.b32.xlu0 %v975, 64
    %v978 = vpop.permute.xlu0 %977
    %v980 = vadd.f32 %v974, %v978
    %v981 = vtanh.pop %v980
    %v982 = vmul.f32 %v972, %v981
    %984 = vrot.lane.b32.xlu0 %v982, 64
    %v985 = vpop.permute.xlu0 %984
    %v986 = vsel %vm284, %v985, 0
    %988 = vmatprep.subr.mxu0 %v269
    %989 = vmatpush1.msra.mxu0 %v268
    %990 = vmatprep.subr.mxu0 %v271
    %991 = vmatpush1.msra.mxu0 %v270
    %992 = vmatprep.subr.mxu0 %v273
    %993 = vmatpush1.msra.mxu0 %v272
    %994 = vmatprep.subr.mxu0 %v275
    %995 = vmatpush1.msra.mxu0 %v274
    %996 = vmatprep.subr.mxu0 %v277
    %997 = vmatpush1.msra.mxu0 %v276
    %998 = vmatprep.subr.mxu0 %v279
    %999 = vmatpush1.msra.mxu0 %v278
    %1000 = vmatprep.subr.mxu0 %v281
    %1001 = vmatpush1.msra.mxu0 %v280
    %1002 = vmatprep.subr.mxu0 %v283
    %1003 = vmatpush1.msra.mxu0 %v282
    %1004 = vmatprep.subr.mxu0 0.0
    %1005 = vmatpush1.msra.mxu0 0.0
    %1006 = vmatprep.subr.mxu0 0.0
    %1007 = vmatpush1.msra.mxu0 0.0
    %1008 = vmatprep.subr.mxu0 0.0
    %1009 = vmatpush1.msra.mxu0 0.0
    %1010 = vmatprep.subr.mxu0 0.0
    %1011 = vmatpush1.msra.mxu0 0.0
    %1012 = vmatprep.subr.mxu0 0.0
    %1013 = vmatpush1.msra.mxu0 0.0
    %1014 = vmatprep.subr.mxu0 0.0
    %1015 = vmatpush1.msra.mxu0 0.0
    %1016 = vmatprep.subr.mxu0 0.0
    %1017 = vmatpush1.msra.mxu0 0.0
    %1018 = vmatprep.subr.mxu0 0.0
    %1019 = vmatpush1.msra.mxu0 0.0
    %1020 = vmatprep.subr.mxu0 0.0
    %1021 = vmatpush1.msra.mxu0 0.0
    %1022 = vmatprep.subr.mxu0 0.0
    %1023 = vmatpush1.msra.mxu0 0.0
    %1024 = vmatprep.subr.mxu0 0.0
    %1025 = vmatpush1.msra.mxu0 0.0
    %1026 = vmatprep.subr.mxu0 0.0
    %1027 = vmatpush1.msra.mxu0 0.0
    %1028 = vmatprep.subr.mxu0 0.0
    %1029 = vmatpush1.msra.mxu0 0.0
    %1030 = vmatprep.subr.mxu0 0.0
    %1031 = vmatpush1.msra.mxu0 0.0
    %1032 = vmatprep.subr.mxu0 0.0
    %1033 = vmatpush1.msra.mxu0 0.0
    %1034 = vmatprep.subr.mxu0 0.0
    %1035 = vmatpush1.msra.mxu0 0.0
    %1036 = vmatprep.subr.mxu0 0.0
    %1037 = vmatpush1.msra.mxu0 0.0
    %1038 = vmatprep.subr.mxu0 0.0
    %1039 = vmatpush1.msra.mxu0 0.0
    %1040 = vmatprep.subr.mxu0 0.0
    %1041 = vmatpush1.msra.mxu0 0.0
    %1042 = vmatprep.subr.mxu0 0.0
    %1043 = vmatpush1.msra.mxu0 0.0
    %1044 = vmatprep.subr.mxu0 0.0
    %1045 = vmatpush1.msra.mxu0 0.0
    %1046 = vmatprep.subr.mxu0 0.0
    %1047 = vmatpush1.msra.mxu0 0.0
    %1048 = vmatprep.subr.mxu0 0.0
    %1049 = vmatpush1.msra.mxu0 0.0
    %1050 = vmatprep.subr.mxu0 0.0
    %1051 = vmatpush1.msra.mxu0 0.0
    %1052 = vmatprep.mubr.f32.mxu0 0.0
    %1053 = vmatmul.mubr.f32.gmra.mrb[0].mxu0 %v986
    %v1054 = vpop.f32.mrb[0].mxu0
    %v1055 = vadd.f32 0.0, %v1054
    %v1056 = vpop.f32.mrb[0].mxu0
    %v1057 = vadd.f32 0.0, %v1056
    %1058 = vdwg.mxu0
    %v1059 = vadd.f32 %v264, %v1055
    %v1060 = vadd.f32 %v266, %v1057
    %v1061 = vxor.u32 %v1059, 2147483648
    %v1062 = vxor.u32 %v1060, 2147483648
    %v1063 = vmul.f32 %v1061, 1.442695
    %v1064 = vpow.pop %v1063
    %v1065 = vmul.f32 %v1062, 1.442695
    %v1066 = vpow.pop %v1065
    %v1067 = vadd.f32 %v1064, 1.0
    %v1068 = vadd.f32 %v1066, 1.0
    %v1069 = vrcp.pop %v1067
    %v1070 = vmul.f32 1.0, %v1069
    %v1071 = vrcp.pop %v1068
    %v1072 = vmul.f32 1.0, %v1071
    %v1073 = vtanh.pop %v1060
    %v1074 = vmul.f32 %v1070, %v980
    %v1075 = vmul.f32 %v1070, %v1073
    %1077 = vrot.lane.b32.xlu0 %v1075, 64
    %v1078 = vpop.permute.xlu0 %1077
    %v1080 = vadd.f32 %v1074, %v1078
    %v1081 = vtanh.pop %v1080
    %v1082 = vmul.f32 %v1072, %v1081
    %v1083 = vld [vmem:[#allocation2 + $0x180] sm:$0xff]
    %v1084 = vld [vmem:[#allocation2 + $0x190] sm:$0xff]
    %v1085 = vld [vmem:[#allocation2 + $0x1a0] sm:$0xff]
    %v1086 = vld [vmem:[#allocation2 + $0x1b0] sm:$0xff]
    %v1087 = vld [vmem:[#allocation2 + $0x1c0] sm:$0xff]
    %v1088 = vld [vmem:[#allocation2 + $0x1d0] sm:$0xff]
    %v1089 = vld [vmem:[#allocation2 + $0x1e0] sm:$0xff]
    %v1090 = vld [vmem:[#allocation2 + $0x1f0] sm:$0xff]
    %v1091 = vld [vmem:[#allocation2 + $0x200] ss:$0 sm:$0xff]
    %v1092 = vld [vmem:[#allocation2 + $0x210] sm:$0xff]
    %v1093 = vld [vmem:[#allocation2 + $0x220] sm:$0xff]
    %v1094 = vld [vmem:[#allocation2 + $0x230] sm:$0xff]
    %v1095 = vld [vmem:[#allocation2 + $0x240] sm:$0xff]
    %v1096 = vld [vmem:[#allocation2 + $0x250] sm:$0xff]
    %v1097 = vld [vmem:[#allocation2 + $0x260] sm:$0xff]
    %v1098 = vld [vmem:[#allocation2 + $0x270] sm:$0xff]
    %v1099 = vld [vmem:[#allocation2 + $0x280] sm:$0xff]
    %v1100 = vld [vmem:[#allocation2 + $0x290] sm:$0xff]
    %v1101 = vld [vmem:[#allocation2 + $0x2a0] sm:$0xff]
    %v1102 = vld [vmem:[#allocation2 + $0x2b0] sm:$0xff]
    %v1103 = vld [vmem:[#allocation2 + $0x2c0] sm:$0xff]
    %v1104 = vld [vmem:[#allocation2 + $0x2d0] sm:$0xff]
    %v1105 = vld [vmem:[#allocation2 + $0x2e0] sm:$0xff]
    %v1106 = vld [vmem:[#allocation2 + $0x2f0] sm:$0xff]
    %v1107 = vld [vmem:[#allocation2 + $0x300] sm:$0xff]
    %v1108 = vld [vmem:[#allocation2 + $0x310] ss:$0 sm:$0xff]
    %1110 = vrot.lane.b32.xlu0 %v1082, 64
    %v1111 = vpop.permute.xlu0 %1110
    %v1112 = vsel %vm284, %v1111, 0
    %1114 = vmatprep.subr.mxu0 0.0
    %1115 = vmatpush1.msra.mxu0 %v1083
    %1116 = vmatprep.subr.mxu0 0.0
    %1117 = vmatpush1.msra.mxu0 %v1084
    %1118 = vmatprep.subr.mxu0 0.0
    %1119 = vmatpush1.msra.mxu0 %v1085
    %1120 = vmatprep.subr.mxu0 0.0
    %1121 = vmatpush1.msra.mxu0 %v1086
    %1122 = vmatprep.subr.mxu0 0.0
    %1123 = vmatpush1.msra.mxu0 %v1087
    %1124 = vmatprep.subr.mxu0 0.0
    %1125 = vmatpush1.msra.mxu0 %v1088
    %1126 = vmatprep.subr.mxu0 0.0
    %1127 = vmatpush1.msra.mxu0 %v1089
    %1128 = vmatprep.subr.mxu0 0.0
    %1129 = vmatpush1.msra.mxu0 %v1090
    %1130 = vmatprep.subr.mxu0 0.0
    %1131 = vmatpush1.msra.mxu0 0.0
    %1132 = vmatprep.subr.mxu0 0.0
    %1133 = vmatpush1.msra.mxu0 0.0
    %1134 = vmatprep.subr.mxu0 0.0
    %1135 = vmatpush1.msra.mxu0 0.0
    %1136 = vmatprep.subr.mxu0 0.0
    %1137 = vmatpush1.msra.mxu0 0.0
    %1138 = vmatprep.subr.mxu0 0.0
    %1139 = vmatpush1.msra.mxu0 0.0
    %1140 = vmatprep.subr.mxu0 0.0
    %1141 = vmatpush1.msra.mxu0 0.0
    %1142 = vmatprep.subr.mxu0 0.0
    %1143 = vmatpush1.msra.mxu0 0.0
    %1144 = vmatprep.subr.mxu0 0.0
    %1145 = vmatpush1.msra.mxu0 0.0
    %1146 = vmatprep.subr.mxu0 0.0
    %1147 = vmatpush1.msra.mxu0 0.0
    %1148 = vmatprep.subr.mxu0 0.0
    %1149 = vmatpush1.msra.mxu0 0.0
    %1150 = vmatprep.subr.mxu0 0.0
    %1151 = vmatpush1.msra.mxu0 0.0
    %1152 = vmatprep.subr.mxu0 0.0
    %1153 = vmatpush1.msra.mxu0 0.0
    %1154 = vmatprep.subr.mxu0 0.0
    %1155 = vmatpush1.msra.mxu0 0.0
    %1156 = vmatprep.subr.mxu0 0.0
    %1157 = vmatpush1.msra.mxu0 0.0
    %1158 = vmatprep.subr.mxu0 0.0
    %1159 = vmatpush1.msra.mxu0 0.0
    %1160 = vmatprep.subr.mxu0 0.0
    %1161 = vmatpush1.msra.mxu0 0.0
    %1162 = vmatprep.subr.mxu0 0.0
    %1163 = vmatpush1.msra.mxu0 0.0
    %1164 = vmatprep.subr.mxu0 0.0
    %1165 = vmatpush1.msra.mxu0 0.0
    %1166 = vmatprep.subr.mxu0 0.0
    %1167 = vmatpush1.msra.mxu0 0.0
    %1168 = vmatprep.subr.mxu0 0.0
    %1169 = vmatpush1.msra.mxu0 0.0
    %1170 = vmatprep.subr.mxu0 0.0
    %1171 = vmatpush1.msra.mxu0 0.0
    %1172 = vmatprep.subr.mxu0 0.0
    %1173 = vmatpush1.msra.mxu0 0.0
    %1174 = vmatprep.subr.mxu0 0.0
    %1175 = vmatpush1.msra.mxu0 0.0
    %1176 = vmatprep.subr.mxu0 0.0
    %1177 = vmatpush1.msra.mxu0 0.0
    %1178 = vmatprep.mubr.f32.mxu0 0.0
    %1179 = vmatmul.mubr.f32.gmra.mrb[0].mxu0 %v1112
    %v1180 = vpop.f32.mrb[0].mxu0
    %v1181 = vadd.f32 %v1091, %v1180
    %v1182 = vpop.f32.mrb[0].mxu0
    %1183 = vdwg.mxu0
    %v1184 = vmax.f32 %v1181, 0.0
    %1185 = vmatprep.subr.mxu0 0.0
    %1186 = vmatpush1.msra.mxu0 %v1092
    %1187 = vmatprep.subr.mxu0 0.0
    %1188 = vmatpush1.msra.mxu0 %v1093
    %1189 = vmatprep.subr.mxu0 0.0
    %1190 = vmatpush1.msra.mxu0 %v1094
    %1191 = vmatprep.subr.mxu0 0.0
    %1192 = vmatpush1.msra.mxu0 %v1095
    %1193 = vmatprep.subr.mxu0 0.0
    %1194 = vmatpush1.msra.mxu0 %v1096
    %1195 = vmatprep.subr.mxu0 0.0
    %1196 = vmatpush1.msra.mxu0 %v1097
    %1197 = vmatprep.subr.mxu0 0.0
    %1198 = vmatpush1.msra.mxu0 %v1098
    %1199 = vmatprep.subr.mxu0 0.0
    %1200 = vmatpush1.msra.mxu0 %v1099
    %1201 = vmatprep.subr.mxu0 0.0
    %1202 = vmatpush1.msra.mxu0 %v1100
    %1203 = vmatprep.subr.mxu0 0.0
    %1204 = vmatpush1.msra.mxu0 %v1101
    %1205 = vmatprep.subr.mxu0 0.0
    %1206 = vmatpush1.msra.mxu0 %v1102
    %1207 = vmatprep.subr.mxu0 0.0
    %1208 = vmatpush1.msra.mxu0 %v1103
    %1209 = vmatprep.subr.mxu0 0.0
    %1210 = vmatpush1.msra.mxu0 %v1104
    %1211 = vmatprep.subr.mxu0 0.0
    %1212 = vmatpush1.msra.mxu0 %v1105
    %1213 = vmatprep.subr.mxu0 0.0
    %1214 = vmatpush1.msra.mxu0 %v1106
    %1215 = vmatprep.subr.mxu0 0.0
    %1216 = vmatpush1.msra.mxu0 %v1107
    %1217 = vmatprep.subr.mxu0 0.0
    %1218 = vmatpush1.msra.mxu0 0.0
    %1219 = vmatprep.subr.mxu0 0.0
    %1220 = vmatpush1.msra.mxu0 0.0
    %1221 = vmatprep.subr.mxu0 0.0
    %1222 = vmatpush1.msra.mxu0 0.0
    %1223 = vmatprep.subr.mxu0 0.0
    %1224 = vmatpush1.msra.mxu0 0.0
    %1225 = vmatprep.subr.mxu0 0.0
    %1226 = vmatpush1.msra.mxu0 0.0
    %1227 = vmatprep.subr.mxu0 0.0
    %1228 = vmatpush1.msra.mxu0 0.0
    %1229 = vmatprep.subr.mxu0 0.0
    %1230 = vmatpush1.msra.mxu0 0.0
    %1231 = vmatprep.subr.mxu0 0.0
    %1232 = vmatpush1.msra.mxu0 0.0
    %1233 = vmatprep.subr.mxu0 0.0
    %1234 = vmatpush1.msra.mxu0 0.0
    %1235 = vmatprep.subr.mxu0 0.0
    %1236 = vmatpush1.msra.mxu0 0.0
    %1237 = vmatprep.subr.mxu0 0.0
    %1238 = vmatpush1.msra.mxu0 0.0
    %1239 = vmatprep.subr.mxu0 0.0
    %1240 = vmatpush1.msra.mxu0 0.0
    %1241 = vmatprep.subr.mxu0 0.0
    %1242 = vmatpush1.msra.mxu0 0.0
    %1243 = vmatprep.subr.mxu0 0.0
    %1244 = vmatpush1.msra.mxu0 0.0
    %1245 = vmatprep.subr.mxu0 0.0
    %1246 = vmatpush1.msra.mxu0 0.0
    %1247 = vmatprep.subr.mxu0 0.0
    %1248 = vmatpush1.msra.mxu0 0.0
    %1249 = vmatprep.mubr.f32.mxu0 0.0
    %1250 = vmatmul.mubr.f32.gmra.mrb[0].mxu0 %v1184
    %v1251 = vpop.f32.mrb[0].mxu0
    %v1252 = vadd.f32 %v1108, %v1251
    %v1253 = vpop.f32.mrb[0].mxu0
    %1254 = vdwg.mxu0
    %1255 = vst [vmem:[%s2] sm:$0xff] %v1252
    // Predicated region
    $region14: #{command_classifier_forward.1} parent=1 // pred_check
      _
    $region15: #{command_classifier_forward.1} parent=1 // pred_check_branch
      %1257 = sbr.rel (0) target = $region17
    $region16: #{command_classifier_forward.1} parent=1 // pred_region
      _
    $region17: #{command_classifier_forward.1} parent=1 // pred_fallthru
      _
    // Predicated region
    $region18: #{command_classifier_forward.1} parent=1 // pred_check
      _
    $region19: #{command_classifier_forward.1} parent=1 // pred_check_branch
      %1259 = sbr.rel (0) target = $region21
    $region20: #{command_classifier_forward.1} parent=1 // pred_region
      _
    $region21: #{command_classifier_forward.1} parent=1 // pred_fallthru
      _
    %1260 = vsyncpa [#allocation3], 1

</llo_original>
